<compile_context>
chip_gen: v7x
topology: tpu7x:2x2x1
jax: 0.10.0
libtpu: 0.0.40
codegen_flags: <defaults>
</compile_context>

<pallas_src>
import functools
import math

import jax
import jax.numpy as jnp
from jax.experimental import pallas as pl
from jax.experimental.pallas import tpu as pltpu


# ----------------------------------------------------------------------------
# Fused kernel: all layers + classification head.  Grid = (batch_block, layer).
# ----------------------------------------------------------------------------
def fused_transformer_clf_kernel(
    h_in_ref, mask_ref,
    ln1w_ref, ln1b_ref,
    wqkv_ref, bqkv_ref, wo_ref, bo_ref,
    ln2w_ref, ln2b_ref,
    w1_ref, b1_ref, w2_ref, b2_ref,
    wc_ref, bc_ref,
    logits_ref,
    h_vmem,
    *, num_heads, block_batch):
    l = pl.program_id(1)
    num_layers = pl.num_programs(1)
    M, E = h_vmem.shape                  # M = bb * S rows (batch-block flattened)
    NH = num_heads
    bb = block_batch
    S = M // bb
    hd = E // NH
    eps = 1e-12
    bf16 = jnp.bfloat16
    f32 = jnp.float32

    # Layer 0: load this batch block's embeddings into the resident buffer.
    @pl.when(l == 0)
    def _():
        h_vmem[...] = h_in_ref[...]

    h = h_vmem[...]                                                 # [M, E] f32

    def layer_norm(x, w, b):
        mu = jnp.mean(x, axis=-1, keepdims=True)
        var = jnp.mean((x - mu) ** 2, axis=-1, keepdims=True)
        return (x - mu) * jax.lax.rsqrt(var + eps) * w + b

    # --- LayerNorm 1 ---
    hn = layer_norm(h, ln1w_ref[0], ln1b_ref[0])                    # [M, E]

    # --- Fused QKV projection (softmax scale folded into Wq/bq at pack time) ---
    qkv = jnp.dot(hn.astype(bf16), wqkv_ref[0],
                  preferred_element_type=f32) + bqkv_ref[0]         # [M, 3E]

    def split_heads(base):
        # Static (row, lane) slices of the fused projection -> [bb*NH, S, hd]
        return jnp.stack(
            [qkv[b * S:(b + 1) * S, base + n * hd: base + (n + 1) * hd]
             for b in range(bb) for n in range(NH)], axis=0).astype(bf16)

    qh = split_heads(0)          # already scaled by 1/sqrt(hd) via packed weights
    kh = split_heads(E)
    vh = split_heads(2 * E)

    # --- Scores + causal mask (built in-kernel) + softmax ---
    s = jnp.einsum('nqd,nkd->nqk', qh, kh,
                   preferred_element_type=f32)                      # [bb*NH, S, S]
    row = jax.lax.broadcasted_iota(jnp.int32, (S, S), 0)
    col = jax.lax.broadcasted_iota(jnp.int32, (S, S), 1)
    s = jnp.where((col <= row)[None], s, -1e30)
    s = s - jnp.max(s, axis=-1, keepdims=True)
    p = jnp.exp(s)
    p = p * pl.reciprocal(jnp.sum(p, axis=-1, keepdims=True), approx=True)

    o = jnp.einsum('nqk,nkd->nqd', p.astype(bf16), vh,
                   preferred_element_type=f32)                      # [bb*NH, S, hd]

    # Re-assemble head-major features per sequence -> [M, E], then a single
    # K=E output projection (no Python per-head small matmuls).
    o_cat = jnp.concatenate(
        [jnp.concatenate([o[b * NH + n] for n in range(NH)], axis=-1)
         for b in range(bb)], axis=0)                               # [M, E]
    attn = jnp.dot(o_cat.astype(bf16), wo_ref[0],
                   preferred_element_type=f32) + bo_ref[0]
    h = attn + hn                              # residual onto LN1(h) (matches module)

    # --- LayerNorm 2 + feed-forward ---
    hn2 = layer_norm(h, ln2w_ref[0], ln2b_ref[0])
    ff = jnp.dot(hn2.astype(bf16), w1_ref[0],
                 preferred_element_type=f32) + b1_ref[0]
    ff = jnp.maximum(ff, 0.0)
    ff = jnp.dot(ff.astype(bf16), w2_ref[0],
                 preferred_element_type=f32) + b2_ref[0]
    h_new = ff + hn2                           # residual onto LN2(h) (matches module)
    h_vmem[...] = h_new                        # stays resident for the next layer

    # --- Fused classification head on the last layer step ---
    @pl.when(l == num_layers - 1)
    def _():
        # block-diagonal mask [bb, bb*S] @ [bb*S, E] == per-sequence masked sum
        states = jnp.dot(mask_ref[0], h_new, preferred_element_type=f32)   # [bb, E]
        logits = jnp.dot(states, wc_ref[...],
                         preferred_element_type=f32) + bc_ref[...]         # [bb, Cp]
        logits_ref[0] = logits.astype(logits_ref.dtype)


def fused_forward_call(h_flat, mask_bd, packed, wc_p, bc_p, num_heads, block_batch, seq_len):
    _, E = h_flat.shape
    G, bb, _ = mask_bd.shape                 # G = B // bb
    NL = packed["ln1_w"].shape[0]
    E3 = packed["wqkv"].shape[2]
    H = packed["w1"].shape[2]
    Cp = wc_p.shape[1]

    def layer_spec(shape):
        zeros = (0,) * len(shape)
        return pl.BlockSpec((1,) + tuple(shape), lambda b, l: (l,) + zeros)

    def const_spec(shape):
        zeros = (0,) * len(shape)
        return pl.BlockSpec(tuple(shape), lambda b, l: zeros)

    in_specs = [
        pl.BlockSpec((bb * seq_len, E), lambda b, l: (b, 0)),          # embeddings (flat)
        pl.BlockSpec((1, bb, bb * seq_len), lambda b, l: (b, 0, 0)),   # block-diag clf mask
        layer_spec((1, E)), layer_spec((1, E)),                        # ln1 w, b
        layer_spec((E, E3)), layer_spec((1, E3)),                      # wqkv, bqkv
        layer_spec((E, E)), layer_spec((1, E)),                        # wo, bo
        layer_spec((1, E)), layer_spec((1, E)),                        # ln2 w, b
        layer_spec((E, H)), layer_spec((1, H)),                        # ffn w1, b1
        layer_spec((H, E)), layer_spec((1, E)),                        # ffn w2, b2
        const_spec((E, Cp)), const_spec((1, Cp)),                      # clf head (padded)
    ]

    out = pl.pallas_call(
        functools.partial(fused_transformer_clf_kernel,
                          num_heads=num_heads, block_batch=bb),
        out_shape=jax.ShapeDtypeStruct((G, bb, Cp), jnp.float32),
        grid=(G, NL),
        in_specs=in_specs,
        out_specs=pl.BlockSpec((1, bb, Cp), lambda b, l: (b, 0, 0)),
        scratch_shapes=[pltpu.VMEM((bb * seq_len, E), jnp.float32)],   # resident hidden state
        compiler_params=pltpu.CompilerParams(
            dimension_semantics=("parallel", "arbitrary"),   # batch blocks parallel, layers sequential
            vmem_limit_bytes=48 * 1024 * 1024,               # > v5e/v6e defaults, < v7x 64 MiB physical
        ),
    )(h_flat, mask_bd,
      packed["ln1_w"], packed["ln1_b"],
      packed["wqkv"], packed["bqkv"], packed["wo"], packed["bo"],
      packed["ln2_w"], packed["ln2_b"],
      packed["w1"], packed["b1"], packed["w2"], packed["b2"],
      wc_p, bc_p)
    return out


# ----------------------------------------------------------------------------
# Parameter init (PyTorch layout) and packing to kernel layout
# ----------------------------------------------------------------------------
def init_params(key, E, H, V, P, NL, C):
    n_per_layer = 6
    keys = jax.random.split(key, 3 + NL * n_per_layer)

    def init(k, shape):
        return (0.02 * jax.random.normal(k, shape)).astype(jnp.float32)

    params = {
        "tok_emb": init(keys[0], (V, E)),
        "pos_emb": init(keys[1], (P, E)),
        "clf_w": init(keys[2], (C, E)),            # nn.Linear weight [out, in]
        "clf_b": jnp.zeros((C,), jnp.float32),
        "layers": [],
    }
    idx = 3
    for _ in range(NL):
        lk = keys[idx:idx + n_per_layer]
        idx += n_per_layer
        params["layers"].append({
            "ln1_w": jnp.ones((E,), jnp.float32),
            "ln1_b": jnp.zeros((E,), jnp.float32),
            "in_proj_w": init(lk[0], (3 * E, E)),  # nn.MultiheadAttention in_proj_weight
            "in_proj_b": init(lk[1], (3 * E,)),
            "out_proj_w": init(lk[2], (E, E)),
            "out_proj_b": jnp.zeros((E,), jnp.float32),
            "ln2_w": jnp.ones((E,), jnp.float32),
            "ln2_b": jnp.zeros((E,), jnp.float32),
            "ffn_w1": init(lk[3], (H, E)),         # Linear(E->H).weight
            "ffn_b1": init(lk[4], (H,)),
            "ffn_w2": init(lk[5], (E, H)),         # Linear(H->E).weight
            "ffn_b2": jnp.zeros((E,), jnp.float32),
        })
    return params


def pack_params(params, num_heads):
    """Stack per-layer params on a leading [NL] axis in kernel-friendly layout.

    The fused Wqkv is [E, 3E] (columns = [q | k | v], each head-major), with the
    1/sqrt(hd) softmax scale folded into the q block (and q bias).  Weights that
    feed the MXU are stored bf16; biases / LN params stay f32.
    """
    E = params["tok_emb"].shape[1]
    hd = E // num_heads
    scale = 1.0 / math.sqrt(hd)
    layers = params["layers"]
    bf16 = jnp.bfloat16

    def stack(fn, dtype=jnp.float32):
        return jnp.stack([fn(lp) for lp in layers], axis=0).astype(dtype)

    def wqkv(lp):
        w = lp["in_proj_w"]                               # [3E, E], rows = out features
        return jnp.concatenate(
            [w[:E].T * scale, w[E:2 * E].T, w[2 * E:].T], axis=1)   # [E, 3E]

    def bqkv(lp):
        b = lp["in_proj_b"]                               # [3E]
        return jnp.concatenate([b[:E] * scale, b[E:]], axis=0)[None, :]   # [1, 3E]

    return {
        "ln1_w": stack(lambda lp: lp["ln1_w"][None, :]),
        "ln1_b": stack(lambda lp: lp["ln1_b"][None, :]),
        "wqkv": stack(wqkv, bf16),
        "bqkv": stack(bqkv),
        "wo": stack(lambda lp: lp["out_proj_w"].T, bf16),
        "bo": stack(lambda lp: lp["out_proj_b"][None, :]),
        "ln2_w": stack(lambda lp: lp["ln2_w"][None, :]),
        "ln2_b": stack(lambda lp: lp["ln2_b"][None, :]),
        "w1": stack(lambda lp: lp["ffn_w1"].T, bf16),
        "b1": stack(lambda lp: lp["ffn_b1"][None, :]),
        "w2": stack(lambda lp: lp["ffn_w2"].T, bf16),
        "b2": stack(lambda lp: lp["ffn_b2"][None, :]),
    }


def forward(params, packed, x, clf_tokens_mask, num_heads, block_batch=None):
    """x: [S, B] int token ids; clf_tokens_mask: [S, B] float -> logits [B, C]."""
    S, B = x.shape
    E = params["tok_emb"].shape[1]
    C = params["clf_w"].shape[0]
    bb = B if block_batch is None else block_batch
    assert B % bb == 0, "block_batch must divide the batch size"

    # Embedding gathers are glue (plain JAX); dropout is identity in eval mode.
    tok = params["tok_emb"][x]                                   # [S, B, E]
    pos = params["pos_emb"][jnp.arange(S)][:, None, :]           # [S, 1, E]
    h = jnp.transpose(tok + pos, (1, 0, 2)).astype(jnp.float32)  # [B, S, E]
    h_flat = h.reshape(B * S, E)                                 # batch-block flattened rows

    # Block-diagonal classification-token mask: [G, bb, bb*S] so the in-kernel
    # masked sequence reduction is one matmul per batch block.
    m = clf_tokens_mask.T.astype(jnp.float32).reshape(B // bb, bb, S)    # [G, bb, S]
    eye = jnp.eye(bb, dtype=jnp.float32)
    mask_bd = (m[:, :, None, :] * eye[None, :, :, None]).reshape(B // bb, bb, bb * S)

    # Lane-pad the classification head to 128 output columns (lane-dense store).
    Cp = ((C + 127) // 128) * 128
    wc_p = jnp.zeros((E, Cp), jnp.float32).at[:, :C].set(params["clf_w"].T)
    bc_p = jnp.zeros((1, Cp), jnp.float32).at[:, :C].set(params["clf_b"][None, :])

    out = fused_forward_call(h_flat, mask_bd, packed, wc_p, bc_p, num_heads, bb, S)
    return out.reshape(B, Cp)[:, :C]


if __name__ == "__main__":
    # small shapes consistent with the module
    S, B = 8, 2
    E, H = 32, 64
    V, P = 50, 16
    NH, NL, C = 4, 2, 3

    key = jax.random.PRNGKey(0)
    k_x, k_p = jax.random.split(key)
    x = jax.random.randint(k_x, (S, B), 0, V, dtype=jnp.int32)   # [seq, batch] token ids
    # mark the last token of every sequence as the classification token
    clf_tokens_mask = jnp.zeros((S, B), jnp.float32).at[-1, :].set(1.0)

    params = init_params(k_p, E, H, V, P, NL, C)
    packed = pack_params(params, NH)

    logits = forward(params, packed, x, clf_tokens_mask, NH, block_batch=B)
    jax.block_until_ready(logits)
    assert logits.shape == (B, C)
    print("KERNEL_OK")
</pallas_src>

<mosaic_0001>
module attributes {stable_mosaic.version = 11 : i64} {
  func.func @fused_transformer_clf_kernel(%arg0: i32, %arg1: i32, %arg2: memref<16x32xf32, #tpu.memory_space<vmem>>, %arg3: memref<1x2x16xf32, #tpu.memory_space<vmem>>, %arg4: memref<1x1x32xf32, #tpu.memory_space<vmem>>, %arg5: memref<1x1x32xf32, #tpu.memory_space<vmem>>, %arg6: memref<1x32x96xbf16, #tpu.memory_space<vmem>>, %arg7: memref<1x1x96xf32, #tpu.memory_space<vmem>>, %arg8: memref<1x32x32xbf16, #tpu.memory_space<vmem>>, %arg9: memref<1x1x32xf32, #tpu.memory_space<vmem>>, %arg10: memref<1x1x32xf32, #tpu.memory_space<vmem>>, %arg11: memref<1x1x32xf32, #tpu.memory_space<vmem>>, %arg12: memref<1x32x64xbf16, #tpu.memory_space<vmem>>, %arg13: memref<1x1x64xf32, #tpu.memory_space<vmem>>, %arg14: memref<1x64x32xbf16, #tpu.memory_space<vmem>>, %arg15: memref<1x1x32xf32, #tpu.memory_space<vmem>>, %arg16: memref<32x128xf32, #tpu.memory_space<vmem>>, %arg17: memref<1x128xf32, #tpu.memory_space<vmem>>, %arg18: memref<1x2x128xf32, #tpu.memory_space<vmem>>, %arg19: memref<16x32xf32, #tpu.memory_space<vmem>>) attributes {dimension_semantics = [#tpu.dimension_semantics<parallel>, #tpu.dimension_semantics<arbitrary>], iteration_bounds = array<i64: 1, 2>, scalar_prefetch = 0 : i64, scratch_operands = 1 : i64, tpu.core_type = #tpu.core_type<tc>, window_params = [{transform_indices = @transform_0, window_bounds = array<i64: 16, 32>}, {transform_indices = @transform_1, window_bounds = array<i64: 1, 2, 16>}, {transform_indices = @transform_2, window_bounds = array<i64: 1, 1, 32>}, {transform_indices = @transform_3, window_bounds = array<i64: 1, 1, 32>}, {transform_indices = @transform_4, window_bounds = array<i64: 1, 32, 96>}, {transform_indices = @transform_5, window_bounds = array<i64: 1, 1, 96>}, {transform_indices = @transform_6, window_bounds = array<i64: 1, 32, 32>}, {transform_indices = @transform_7, window_bounds = array<i64: 1, 1, 32>}, {transform_indices = @transform_8, window_bounds = array<i64: 1, 1, 32>}, {transform_indices = @transform_9, window_bounds = array<i64: 1, 1, 32>}, {transform_indices = @transform_10, window_bounds = array<i64: 1, 32, 64>}, {transform_indices = @transform_11, window_bounds = array<i64: 1, 1, 64>}, {transform_indices = @transform_12, window_bounds = array<i64: 1, 64, 32>}, {transform_indices = @transform_13, window_bounds = array<i64: 1, 1, 32>}, {pipeline_mode = #tpu.pipeline_mode<synchronous>, transform_indices = @transform_14, window_bounds = array<i64: 32, 128>}, {pipeline_mode = #tpu.pipeline_mode<synchronous>, transform_indices = @transform_15, window_bounds = array<i64: 1, 128>}, {transform_indices = @transform_16, window_bounds = array<i64: 1, 2, 128>}]} {
    %c0_i32 = arith.constant 0 : i32
    %0 = arith.cmpi eq, %arg1, %c0_i32 : i32
    %1 = arith.extui %0 : i1 to i32
    %c0_i32_0 = arith.constant 0 : i32
    %2 = arith.cmpi ne, %1, %c0_i32_0 : i32
    scf.if %2 {
      %c0_60 = arith.constant 0 : index
      %c0_61 = arith.constant 0 : index
      %190 = vector.load %arg2[%c0_60, %c0_61] : memref<16x32xf32, #tpu.memory_space<vmem>>, vector<16x32xf32>
      %c0_62 = arith.constant 0 : index
      %c0_63 = arith.constant 0 : index
      %191 = vector.load %arg19[%c0_62, %c0_63] : memref<16x32xf32, #tpu.memory_space<vmem>>, vector<16x32xf32>
      tpu.vector_store %arg19[%c0_62, %c0_63], %190 {strides = array<i32>} : memref<16x32xf32, #tpu.memory_space<vmem>>, vector<16x32xf32>,
    } else {
    }
    %c0 = arith.constant 0 : index
    %c0_1 = arith.constant 0 : index
    %3 = vector.load %arg19[%c0, %c0_1] : memref<16x32xf32, #tpu.memory_space<vmem>>, vector<16x32xf32>
    %c0_2 = arith.constant 0 : index
    %c0_3 = arith.constant 0 : index
    %c0_4 = arith.constant 0 : index
    %4 = vector.load %arg4[%c0_2, %c0_3, %c0_4] : memref<1x1x32xf32, #tpu.memory_space<vmem>>, vector<1x1x32xf32>
    %5 = vector.shape_cast %4 : vector<1x1x32xf32> to vector<1x32xf32>
    %c0_5 = arith.constant 0 : index
    %c0_6 = arith.constant 0 : index
    %c0_7 = arith.constant 0 : index
    %6 = vector.load %arg5[%c0_5, %c0_6, %c0_7] : memref<1x1x32xf32, #tpu.memory_space<vmem>>, vector<1x1x32xf32>
    %7 = vector.shape_cast %6 : vector<1x1x32xf32> to vector<1x32xf32>
    %cst = arith.constant dense<0.000000e+00> : vector<16xf32>
    %8 = vector.multi_reduction <add>, %3, %cst [1] : vector<16x32xf32> to vector<16xf32>
    %9 = vector.shape_cast %8 : vector<16xf32> to vector<16x1xf32>
    %cst_8 = arith.constant 3.200000e+01 : f32
    %10 = vector.broadcast %cst_8 : f32 to vector<16x1xf32>
    %11 = arith.divf %9, %10 : vector<16x1xf32>
    %12 = vector.broadcast %11 : vector<16x1xf32> to vector<16x32xf32>
    %13 = arith.subf %3, %12 : vector<16x32xf32>
    %14 = arith.mulf %13, %13 : vector<16x32xf32>
    %cst_9 = arith.constant dense<0.000000e+00> : vector<16xf32>
    %15 = vector.multi_reduction <add>, %14, %cst_9 [1] : vector<16x32xf32> to vector<16xf32>
    %16 = vector.shape_cast %15 : vector<16xf32> to vector<16x1xf32>
    %cst_10 = arith.constant 3.200000e+01 : f32
    %17 = vector.broadcast %cst_10 : f32 to vector<16x1xf32>
    %18 = arith.divf %16, %17 : vector<16x1xf32>
    %19 = vector.broadcast %11 : vector<16x1xf32> to vector<16x32xf32>
    %20 = arith.subf %3, %19 : vector<16x32xf32>
    %cst_11 = arith.constant 9.99999996E-13 : f32
    %21 = vector.broadcast %cst_11 : f32 to vector<16x1xf32>
    %22 = arith.addf %18, %21 : vector<16x1xf32>
    %23 = math.rsqrt %22 : vector<16x1xf32>
    %24 = vector.broadcast %23 : vector<16x1xf32> to vector<16x32xf32>
    %25 = arith.mulf %20, %24 : vector<16x32xf32>
    %26 = vector.broadcast %5 : vector<1x32xf32> to vector<16x32xf32>
    %27 = arith.mulf %25, %26 : vector<16x32xf32>
    %28 = vector.broadcast %7 : vector<1x32xf32> to vector<16x32xf32>
    %29 = arith.addf %27, %28 : vector<16x32xf32>
    %30 = arith.truncf %29 : vector<16x32xf32> to vector<16x32xbf16>
    %c0_12 = arith.constant 0 : index
    %c0_13 = arith.constant 0 : index
    %c0_14 = arith.constant 0 : index
    %31 = vector.load %arg6[%c0_12, %c0_13, %c0_14] : memref<1x32x96xbf16, #tpu.memory_space<vmem>>, vector<1x32x96xbf16>
    %32 = vector.shape_cast %31 : vector<1x32x96xbf16> to vector<32x96xbf16>
    %cst_15 = arith.constant dense<0.000000e+00> : vector<16x96xf32>
    %33 = tpu.matmul %30, %32, %cst_15 {dimension_numbers = #tpu.dot_dimension_numbers<[1], [0], [0], [1], [0, 0, 1, 1], [], []>} : vector<16x32xbf16>, vector<32x96xbf16>, vector<16x96xf32> -> vector<16x96xf32>
    %c0_16 = arith.constant 0 : index
    %c0_17 = arith.constant 0 : index
    %c0_18 = arith.constant 0 : index
    %34 = vector.load %arg7[%c0_16, %c0_17, %c0_18] : memref<1x1x96xf32, #tpu.memory_space<vmem>>, vector<1x1x96xf32>
    %35 = vector.shape_cast %34 : vector<1x1x96xf32> to vector<1x96xf32>
    %36 = vector.broadcast %35 : vector<1x96xf32> to vector<16x96xf32>
    %37 = arith.addf %33, %36 : vector<16x96xf32>
    %38 = vector.extract_strided_slice %37 {offsets = [0, 0], sizes = [8, 8], strides = [1, 1]} : vector<16x96xf32> to vector<8x8xf32>
    %39 = vector.extract_strided_slice %37 {offsets = [0, 8], sizes = [8, 8], strides = [1, 1]} : vector<16x96xf32> to vector<8x8xf32>
    %40 = vector.extract_strided_slice %37 {offsets = [0, 16], sizes = [8, 8], strides = [1, 1]} : vector<16x96xf32> to vector<8x8xf32>
    %41 = vector.extract_strided_slice %37 {offsets = [0, 24], sizes = [8, 8], strides = [1, 1]} : vector<16x96xf32> to vector<8x8xf32>
    %42 = vector.extract_strided_slice %37 {offsets = [8, 0], sizes = [8, 8], strides = [1, 1]} : vector<16x96xf32> to vector<8x8xf32>
    %43 = vector.extract_strided_slice %37 {offsets = [8, 8], sizes = [8, 8], strides = [1, 1]} : vector<16x96xf32> to vector<8x8xf32>
    %44 = vector.extract_strided_slice %37 {offsets = [8, 16], sizes = [8, 8], strides = [1, 1]} : vector<16x96xf32> to vector<8x8xf32>
    %45 = vector.extract_strided_slice %37 {offsets = [8, 24], sizes = [8, 8], strides = [1, 1]} : vector<16x96xf32> to vector<8x8xf32>
    %46 = vector.shape_cast %38 : vector<8x8xf32> to vector<1x8x8xf32>
    %47 = vector.shape_cast %39 : vector<8x8xf32> to vector<1x8x8xf32>
    %48 = vector.shape_cast %40 : vector<8x8xf32> to vector<1x8x8xf32>
    %49 = vector.shape_cast %41 : vector<8x8xf32> to vector<1x8x8xf32>
    %50 = vector.shape_cast %42 : vector<8x8xf32> to vector<1x8x8xf32>
    %51 = vector.shape_cast %43 : vector<8x8xf32> to vector<1x8x8xf32>
    %52 = vector.shape_cast %44 : vector<8x8xf32> to vector<1x8x8xf32>
    %53 = vector.shape_cast %45 : vector<8x8xf32> to vector<1x8x8xf32>
    %54 = tpu.concatenate %46, %47, %48, %49, %50, %51, %52, %53 in 0 : vector<1x8x8xf32>, vector<1x8x8xf32>, vector<1x8x8xf32>, vector<1x8x8xf32>, vector<1x8x8xf32>, vector<1x8x8xf32>, vector<1x8x8xf32>, vector<1x8x8xf32> -> vector<8x8x8xf32>
    %55 = arith.truncf %54 : vector<8x8x8xf32> to vector<8x8x8xbf16>
    %56 = vector.extract_strided_slice %37 {offsets = [0, 32], sizes = [8, 8], strides = [1, 1]} : vector<16x96xf32> to vector<8x8xf32>
    %57 = vector.extract_strided_slice %37 {offsets = [0, 40], sizes = [8, 8], strides = [1, 1]} : vector<16x96xf32> to vector<8x8xf32>
    %58 = vector.extract_strided_slice %37 {offsets = [0, 48], sizes = [8, 8], strides = [1, 1]} : vector<16x96xf32> to vector<8x8xf32>
    %59 = vector.extract_strided_slice %37 {offsets = [0, 56], sizes = [8, 8], strides = [1, 1]} : vector<16x96xf32> to vector<8x8xf32>
    %60 = vector.extract_strided_slice %37 {offsets = [8, 32], sizes = [8, 8], strides = [1, 1]} : vector<16x96xf32> to vector<8x8xf32>
    %61 = vector.extract_strided_slice %37 {offsets = [8, 40], sizes = [8, 8], strides = [1, 1]} : vector<16x96xf32> to vector<8x8xf32>
    %62 = vector.extract_strided_slice %37 {offsets = [8, 48], sizes = [8, 8], strides = [1, 1]} : vector<16x96xf32> to vector<8x8xf32>
    %63 = vector.extract_strided_slice %37 {offsets = [8, 56], sizes = [8, 8], strides = [1, 1]} : vector<16x96xf32> to vector<8x8xf32>
    %64 = vector.shape_cast %56 : vector<8x8xf32> to vector<1x8x8xf32>
    %65 = vector.shape_cast %57 : vector<8x8xf32> to vector<1x8x8xf32>
    %66 = vector.shape_cast %58 : vector<8x8xf32> to vector<1x8x8xf32>
    %67 = vector.shape_cast %59 : vector<8x8xf32> to vector<1x8x8xf32>
    %68 = vector.shape_cast %60 : vector<8x8xf32> to vector<1x8x8xf32>
    %69 = vector.shape_cast %61 : vector<8x8xf32> to vector<1x8x8xf32>
    %70 = vector.shape_cast %62 : vector<8x8xf32> to vector<1x8x8xf32>
    %71 = vector.shape_cast %63 : vector<8x8xf32> to vector<1x8x8xf32>
    %72 = tpu.concatenate %64, %65, %66, %67, %68, %69, %70, %71 in 0 : vector<1x8x8xf32>, vector<1x8x8xf32>, vector<1x8x8xf32>, vector<1x8x8xf32>, vector<1x8x8xf32>, vector<1x8x8xf32>, vector<1x8x8xf32>, vector<1x8x8xf32> -> vector<8x8x8xf32>
    %73 = arith.truncf %72 : vector<8x8x8xf32> to vector<8x8x8xbf16>
    %74 = vector.extract_strided_slice %37 {offsets = [0, 64], sizes = [8, 8], strides = [1, 1]} : vector<16x96xf32> to vector<8x8xf32>
    %75 = vector.extract_strided_slice %37 {offsets = [0, 72], sizes = [8, 8], strides = [1, 1]} : vector<16x96xf32> to vector<8x8xf32>
    %76 = vector.extract_strided_slice %37 {offsets = [0, 80], sizes = [8, 8], strides = [1, 1]} : vector<16x96xf32> to vector<8x8xf32>
    %77 = vector.extract_strided_slice %37 {offsets = [0, 88], sizes = [8, 8], strides = [1, 1]} : vector<16x96xf32> to vector<8x8xf32>
    %78 = vector.extract_strided_slice %37 {offsets = [8, 64], sizes = [8, 8], strides = [1, 1]} : vector<16x96xf32> to vector<8x8xf32>
    %79 = vector.extract_strided_slice %37 {offsets = [8, 72], sizes = [8, 8], strides = [1, 1]} : vector<16x96xf32> to vector<8x8xf32>
    %80 = vector.extract_strided_slice %37 {offsets = [8, 80], sizes = [8, 8], strides = [1, 1]} : vector<16x96xf32> to vector<8x8xf32>
    %81 = vector.extract_strided_slice %37 {offsets = [8, 88], sizes = [8, 8], strides = [1, 1]} : vector<16x96xf32> to vector<8x8xf32>
    %82 = vector.shape_cast %74 : vector<8x8xf32> to vector<1x8x8xf32>
    %83 = vector.shape_cast %75 : vector<8x8xf32> to vector<1x8x8xf32>
    %84 = vector.shape_cast %76 : vector<8x8xf32> to vector<1x8x8xf32>
    %85 = vector.shape_cast %77 : vector<8x8xf32> to vector<1x8x8xf32>
    %86 = vector.shape_cast %78 : vector<8x8xf32> to vector<1x8x8xf32>
    %87 = vector.shape_cast %79 : vector<8x8xf32> to vector<1x8x8xf32>
    %88 = vector.shape_cast %80 : vector<8x8xf32> to vector<1x8x8xf32>
    %89 = vector.shape_cast %81 : vector<8x8xf32> to vector<1x8x8xf32>
    %90 = tpu.concatenate %82, %83, %84, %85, %86, %87, %88, %89 in 0 : vector<1x8x8xf32>, vector<1x8x8xf32>, vector<1x8x8xf32>, vector<1x8x8xf32>, vector<1x8x8xf32>, vector<1x8x8xf32>, vector<1x8x8xf32>, vector<1x8x8xf32> -> vector<8x8x8xf32>
    %91 = arith.truncf %90 : vector<8x8x8xf32> to vector<8x8x8xbf16>
    "tpu.trace_start"() <{level = 10 : i32, message = "nqd,nkd->nqk"}> : () -> ()
    %cst_19 = arith.constant dense<0.000000e+00> : vector<8x8x8xf32>
    %92 = tpu.matmul %55, %73, %cst_19 {dimension_numbers = #tpu.dot_dimension_numbers<[2], [2], [1], [1], [0, 0, 0, 1, 1, 1], [0], [0]>} : vector<8x8x8xbf16>, vector<8x8x8xbf16>, vector<8x8x8xf32> -> vector<8x8x8xf32>
    "tpu.trace_stop"() : () -> ()
    %93 = tpu.iota {dimensions = array<i32: 0>} : vector<8x8xi32>
    %94 = tpu.iota {dimensions = array<i32: 1>} : vector<8x8xi32>
    %95 = arith.cmpi sle, %94, %93 : vector<8x8xi32>
    %96 = vector.shape_cast %95 : vector<8x8xi1> to vector<1x8x8xi1>
    %cst_20 = arith.constant -1.000000e+30 : f32
    %97 = vector.shape_cast %96 : vector<1x8x8xi1> to vector<1x8x8xi1>
    %98 = vector.broadcast %97 : vector<1x8x8xi1> to vector<8x8x8xi1>
    %99 = vector.broadcast %cst_20 : f32 to vector<8x8x8xf32>
    %100 = arith.select %98, %92, %99 : vector<8x8x8xi1>, vector<8x8x8xf32>
    %cst_21 = arith.constant dense<0xFF800000> : vector<8x8xf32>
    %101 = vector.multi_reduction <maximumf>, %100, %cst_21 [2] : vector<8x8x8xf32> to vector<8x8xf32>
    %102 = vector.shape_cast %101 : vector<8x8xf32> to vector<8x8x1xf32>
    %103 = vector.broadcast %102 : vector<8x8x1xf32> to vector<8x8x8xf32>
    %104 = arith.subf %100, %103 : vector<8x8x8xf32>
    %105 = math.exp %104 : vector<8x8x8xf32>
    %cst_22 = arith.constant dense<0.000000e+00> : vector<8x8xf32>
    %106 = vector.multi_reduction <add>, %105, %cst_22 [2] : vector<8x8x8xf32> to vector<8x8xf32>
    %107 = vector.shape_cast %106 : vector<8x8xf32> to vector<8x8x1xf32>
    %108 = tpu.reciprocal %107 {approx = true} : vector<8x8x1xf32> -> vector<8x8x1xf32>
    %109 = vector.broadcast %108 : vector<8x8x1xf32> to vector<8x8x8xf32>
    %110 = arith.mulf %105, %109 : vector<8x8x8xf32>
    %111 = arith.truncf %110 : vector<8x8x8xf32> to vector<8x8x8xbf16>
    "tpu.trace_start"() <{level = 10 : i32, message = "nqk,nkd->nqd"}> : () -> ()
    %cst_23 = arith.constant dense<0.000000e+00> : vector<8x8x8xf32>
    %112 = tpu.matmul %111, %91, %cst_23 {dimension_numbers = #tpu.dot_dimension_numbers<[2], [1], [1], [2], [0, 0, 0, 1, 1, 2], [0], [0]>} : vector<8x8x8xbf16>, vector<8x8x8xbf16>, vector<8x8x8xf32> -> vector<8x8x8xf32>
    "tpu.trace_stop"() : () -> ()
    %113 = vector.extract_strided_slice %112 {offsets = [0, 0, 0], sizes = [1, 8, 8], strides = [1, 1, 1]} : vector<8x8x8xf32> to vector<1x8x8xf32>
    %114 = vector.shape_cast %113 : vector<1x8x8xf32> to vector<8x8xf32>
    %115 = vector.extract_strided_slice %112 {offsets = [1, 0, 0], sizes = [1, 8, 8], strides = [1, 1, 1]} : vector<8x8x8xf32> to vector<1x8x8xf32>
    %116 = vector.shape_cast %115 : vector<1x8x8xf32> to vector<8x8xf32>
    %117 = vector.extract_strided_slice %112 {offsets = [2, 0, 0], sizes = [1, 8, 8], strides = [1, 1, 1]} : vector<8x8x8xf32> to vector<1x8x8xf32>
    %118 = vector.shape_cast %117 : vector<1x8x8xf32> to vector<8x8xf32>
    %119 = vector.extract_strided_slice %112 {offsets = [3, 0, 0], sizes = [1, 8, 8], strides = [1, 1, 1]} : vector<8x8x8xf32> to vector<1x8x8xf32>
    %120 = vector.shape_cast %119 : vector<1x8x8xf32> to vector<8x8xf32>
    %121 = tpu.concatenate %114, %116, %118, %120 in 1 : vector<8x8xf32>, vector<8x8xf32>, vector<8x8xf32>, vector<8x8xf32> -> vector<8x32xf32>
    %122 = vector.extract_strided_slice %112 {offsets = [4, 0, 0], sizes = [1, 8, 8], strides = [1, 1, 1]} : vector<8x8x8xf32> to vector<1x8x8xf32>
    %123 = vector.shape_cast %122 : vector<1x8x8xf32> to vector<8x8xf32>
    %124 = vector.extract_strided_slice %112 {offsets = [5, 0, 0], sizes = [1, 8, 8], strides = [1, 1, 1]} : vector<8x8x8xf32> to vector<1x8x8xf32>
    %125 = vector.shape_cast %124 : vector<1x8x8xf32> to vector<8x8xf32>
    %126 = vector.extract_strided_slice %112 {offsets = [6, 0, 0], sizes = [1, 8, 8], strides = [1, 1, 1]} : vector<8x8x8xf32> to vector<1x8x8xf32>
    %127 = vector.shape_cast %126 : vector<1x8x8xf32> to vector<8x8xf32>
    %128 = vector.extract_strided_slice %112 {offsets = [7, 0, 0], sizes = [1, 8, 8], strides = [1, 1, 1]} : vector<8x8x8xf32> to vector<1x8x8xf32>
    %129 = vector.shape_cast %128 : vector<1x8x8xf32> to vector<8x8xf32>
    %130 = tpu.concatenate %123, %125, %127, %129 in 1 : vector<8x8xf32>, vector<8x8xf32>, vector<8x8xf32>, vector<8x8xf32> -> vector<8x32xf32>
    %131 = tpu.concatenate %121, %130 in 0 : vector<8x32xf32>, vector<8x32xf32> -> vector<16x32xf32>
    %132 = arith.truncf %131 : vector<16x32xf32> to vector<16x32xbf16>
    %c0_24 = arith.constant 0 : index
    %c0_25 = arith.constant 0 : index
    %c0_26 = arith.constant 0 : index
    %133 = vector.load %arg8[%c0_24, %c0_25, %c0_26] : memref<1x32x32xbf16, #tpu.memory_space<vmem>>, vector<1x32x32xbf16>
    %134 = vector.shape_cast %133 : vector<1x32x32xbf16> to vector<32x32xbf16>
    %cst_27 = arith.constant dense<0.000000e+00> : vector<16x32xf32>
    %135 = tpu.matmul %132, %134, %cst_27 {dimension_numbers = #tpu.dot_dimension_numbers<[1], [0], [0], [1], [0, 0, 1, 1], [], []>} : vector<16x32xbf16>, vector<32x32xbf16>, vector<16x32xf32> -> vector<16x32xf32>
    %c0_28 = arith.constant 0 : index
    %c0_29 = arith.constant 0 : index
    %c0_30 = arith.constant 0 : index
    %136 = vector.load %arg9[%c0_28, %c0_29, %c0_30] : memref<1x1x32xf32, #tpu.memory_space<vmem>>, vector<1x1x32xf32>
    %137 = vector.shape_cast %136 : vector<1x1x32xf32> to vector<1x32xf32>
    %138 = vector.broadcast %137 : vector<1x32xf32> to vector<16x32xf32>
    %139 = arith.addf %135, %138 : vector<16x32xf32>
    %140 = arith.addf %139, %29 : vector<16x32xf32>
    %c0_31 = arith.constant 0 : index
    %c0_32 = arith.constant 0 : index
    %c0_33 = arith.constant 0 : index
    %141 = vector.load %arg10[%c0_31, %c0_32, %c0_33] : memref<1x1x32xf32, #tpu.memory_space<vmem>>, vector<1x1x32xf32>
    %142 = vector.shape_cast %141 : vector<1x1x32xf32> to vector<1x32xf32>
    %c0_34 = arith.constant 0 : index
    %c0_35 = arith.constant 0 : index
    %c0_36 = arith.constant 0 : index
    %143 = vector.load %arg11[%c0_34, %c0_35, %c0_36] : memref<1x1x32xf32, #tpu.memory_space<vmem>>, vector<1x1x32xf32>
    %144 = vector.shape_cast %143 : vector<1x1x32xf32> to vector<1x32xf32>
    %cst_37 = arith.constant dense<0.000000e+00> : vector<16xf32>
    %145 = vector.multi_reduction <add>, %140, %cst_37 [1] : vector<16x32xf32> to vector<16xf32>
    %146 = vector.shape_cast %145 : vector<16xf32> to vector<16x1xf32>
    %cst_38 = arith.constant 3.200000e+01 : f32
    %147 = vector.broadcast %cst_38 : f32 to vector<16x1xf32>
    %148 = arith.divf %146, %147 : vector<16x1xf32>
    %149 = vector.broadcast %148 : vector<16x1xf32> to vector<16x32xf32>
    %150 = arith.subf %140, %149 : vector<16x32xf32>
    %151 = arith.mulf %150, %150 : vector<16x32xf32>
    %cst_39 = arith.constant dense<0.000000e+00> : vector<16xf32>
    %152 = vector.multi_reduction <add>, %151, %cst_39 [1] : vector<16x32xf32> to vector<16xf32>
    %153 = vector.shape_cast %152 : vector<16xf32> to vector<16x1xf32>
    %cst_40 = arith.constant 3.200000e+01 : f32
    %154 = vector.broadcast %cst_40 : f32 to vector<16x1xf32>
    %155 = arith.divf %153, %154 : vector<16x1xf32>
    %156 = vector.broadcast %148 : vector<16x1xf32> to vector<16x32xf32>
    %157 = arith.subf %140, %156 : vector<16x32xf32>
    %cst_41 = arith.constant 9.99999996E-13 : f32
    %158 = vector.broadcast %cst_41 : f32 to vector<16x1xf32>
    %159 = arith.addf %155, %158 : vector<16x1xf32>
    %160 = math.rsqrt %159 : vector<16x1xf32>
    %161 = vector.broadcast %160 : vector<16x1xf32> to vector<16x32xf32>
    %162 = arith.mulf %157, %161 : vector<16x32xf32>
    %163 = vector.broadcast %142 : vector<1x32xf32> to vector<16x32xf32>
    %164 = arith.mulf %162, %163 : vector<16x32xf32>
    %165 = vector.broadcast %144 : vector<1x32xf32> to vector<16x32xf32>
    %166 = arith.addf %164, %165 : vector<16x32xf32>
    %167 = arith.truncf %166 : vector<16x32xf32> to vector<16x32xbf16>
    %c0_42 = arith.constant 0 : index
    %c0_43 = arith.constant 0 : index
    %c0_44 = arith.constant 0 : index
    %168 = vector.load %arg12[%c0_42, %c0_43, %c0_44] : memref<1x32x64xbf16, #tpu.memory_space<vmem>>, vector<1x32x64xbf16>
    %169 = vector.shape_cast %168 : vector<1x32x64xbf16> to vector<32x64xbf16>
    %cst_45 = arith.constant dense<0.000000e+00> : vector<16x64xf32>
    %170 = tpu.matmul %167, %169, %cst_45 {dimension_numbers = #tpu.dot_dimension_numbers<[1], [0], [0], [1], [0, 0, 1, 1], [], []>} : vector<16x32xbf16>, vector<32x64xbf16>, vector<16x64xf32> -> vector<16x64xf32>
    %c0_46 = arith.constant 0 : index
    %c0_47 = arith.constant 0 : index
    %c0_48 = arith.constant 0 : index
    %171 = vector.load %arg13[%c0_46, %c0_47, %c0_48] : memref<1x1x64xf32, #tpu.memory_space<vmem>>, vector<1x1x64xf32>
    %172 = vector.shape_cast %171 : vector<1x1x64xf32> to vector<1x64xf32>
    %173 = vector.broadcast %172 : vector<1x64xf32> to vector<16x64xf32>
    %174 = arith.addf %170, %173 : vector<16x64xf32>
    %cst_49 = arith.constant 0.000000e+00 : f32
    %175 = vector.broadcast %cst_49 : f32 to vector<16x64xf32>
    %176 = arith.maximumf %174, %175 : vector<16x64xf32>
    %177 = arith.truncf %176 : vector<16x64xf32> to vector<16x64xbf16>
    %c0_50 = arith.constant 0 : index
    %c0_51 = arith.constant 0 : index
    %c0_52 = arith.constant 0 : index
    %178 = vector.load %arg14[%c0_50, %c0_51, %c0_52] : memref<1x64x32xbf16, #tpu.memory_space<vmem>>, vector<1x64x32xbf16>
    %179 = vector.shape_cast %178 : vector<1x64x32xbf16> to vector<64x32xbf16>
    %cst_53 = arith.constant dense<0.000000e+00> : vector<16x32xf32>
    %180 = tpu.matmul %177, %179, %cst_53 {dimension_numbers = #tpu.dot_dimension_numbers<[1], [0], [0], [1], [0, 0, 1, 1], [], []>} : vector<16x64xbf16>, vector<64x32xbf16>, vector<16x32xf32> -> vector<16x32xf32>
    %c0_54 = arith.constant 0 : index
    %c0_55 = arith.constant 0 : index
    %c0_56 = arith.constant 0 : index
    %181 = vector.load %arg15[%c0_54, %c0_55, %c0_56] : memref<1x1x32xf32, #tpu.memory_space<vmem>>, vector<1x1x32xf32>
    %182 = vector.shape_cast %181 : vector<1x1x32xf32> to vector<1x32xf32>
    %183 = vector.broadcast %182 : vector<1x32xf32> to vector<16x32xf32>
    %184 = arith.addf %180, %183 : vector<16x32xf32>
    %185 = arith.addf %184, %166 : vector<16x32xf32>
    %c0_57 = arith.constant 0 : index
    %c0_58 = arith.constant 0 : index
    %186 = vector.load %arg19[%c0_57, %c0_58] : memref<16x32xf32, #tpu.memory_space<vmem>>, vector<16x32xf32>
    tpu.vector_store %arg19[%c0_57, %c0_58], %185 {strides = array<i32>} : memref<16x32xf32, #tpu.memory_space<vmem>>, vector<16x32xf32>,
    %c1_i32 = arith.constant 1 : i32
    %187 = arith.cmpi eq, %arg1, %c1_i32 : i32
    %188 = arith.extui %187 : i1 to i32
    %c0_i32_59 = arith.constant 0 : i32
    %189 = arith.cmpi ne, %188, %c0_i32_59 : i32
    scf.if %189 {
      %c0_60 = arith.constant 0 : index
      %c0_61 = arith.constant 0 : index
      %c0_62 = arith.constant 0 : index
      %190 = vector.load %arg3[%c0_60, %c0_61, %c0_62] : memref<1x2x16xf32, #tpu.memory_space<vmem>>, vector<1x2x16xf32>
      %191 = vector.shape_cast %190 : vector<1x2x16xf32> to vector<2x16xf32>
      %cst_63 = arith.constant dense<0.000000e+00> : vector<2x32xf32>
      %192 = tpu.matmul %191, %185, %cst_63 {dimension_numbers = #tpu.dot_dimension_numbers<[1], [0], [0], [1], [0, 0, 1, 1], [], []>} : vector<2x16xf32>, vector<16x32xf32>, vector<2x32xf32> -> vector<2x32xf32>
      %c0_64 = arith.constant 0 : index
      %c0_65 = arith.constant 0 : index
      %193 = vector.load %arg16[%c0_64, %c0_65] : memref<32x128xf32, #tpu.memory_space<vmem>>, vector<32x128xf32>
      %cst_66 = arith.constant dense<0.000000e+00> : vector<2x128xf32>
      %194 = tpu.matmul %192, %193, %cst_66 {dimension_numbers = #tpu.dot_dimension_numbers<[1], [0], [0], [1], [0, 0, 1, 1], [], []>} : vector<2x32xf32>, vector<32x128xf32>, vector<2x128xf32> -> vector<2x128xf32>
      %c0_67 = arith.constant 0 : index
      %c0_68 = arith.constant 0 : index
      %195 = vector.load %arg17[%c0_67, %c0_68] : memref<1x128xf32, #tpu.memory_space<vmem>>, vector<1x128xf32>
      %196 = vector.broadcast %195 : vector<1x128xf32> to vector<2x128xf32>
      %197 = arith.addf %194, %196 : vector<2x128xf32>
      %c0_69 = arith.constant 0 : index
      %c0_70 = arith.constant 0 : index
      %c0_71 = arith.constant 0 : index
      %198 = vector.load %arg18[%c0_69, %c0_70, %c0_71] : memref<1x2x128xf32, #tpu.memory_space<vmem>>, vector<1x2x128xf32>
      %199 = vector.shape_cast %198 : vector<1x2x128xf32> to vector<2x128xf32>
      %200 = vector.shape_cast %197 : vector<2x128xf32> to vector<1x2x128xf32>
      tpu.vector_store %arg18[%c0_69, %c0_70, %c0_71], %200 {strides = array<i32>} : memref<1x2x128xf32, #tpu.memory_space<vmem>>, vector<1x2x128xf32>,
    } else {
    }
    return
  }
  func.func @transform_0(%arg0: i32, %arg1: i32) -> (i32, i32) {
    %c0_i32 = arith.constant 0 : i32
    %c0_i32_0 = arith.constant 0 : i32
    return %arg0, %c0_i32 : i32, i32
  }
  func.func @transform_1(%arg0: i32, %arg1: i32) -> (i32, i32, i32) {
    %c0_i32 = arith.constant 0 : i32
    %c0_i32_0 = arith.constant 0 : i32
    %c0_i32_1 = arith.constant 0 : i32
    return %arg0, %c0_i32, %c0_i32_0 : i32, i32, i32
  }
  func.func @transform_2(%arg0: i32, %arg1: i32) -> (i32, i32, i32) {
    %c0_i32 = arith.constant 0 : i32
    %c0_i32_0 = arith.constant 0 : i32
    %c0_i32_1 = arith.constant 0 : i32
    return %arg1, %c0_i32, %c0_i32_0 : i32, i32, i32
  }
  func.func @transform_3(%arg0: i32, %arg1: i32) -> (i32, i32, i32) {
    %c0_i32 = arith.constant 0 : i32
    %c0_i32_0 = arith.constant 0 : i32
    %c0_i32_1 = arith.constant 0 : i32
    return %arg1, %c0_i32, %c0_i32_0 : i32, i32, i32
  }
  func.func @transform_4(%arg0: i32, %arg1: i32) -> (i32, i32, i32) {
    %c0_i32 = arith.constant 0 : i32
    %c0_i32_0 = arith.constant 0 : i32
    %c0_i32_1 = arith.constant 0 : i32
    return %arg1, %c0_i32, %c0_i32_0 : i32, i32, i32
  }
  func.func @transform_5(%arg0: i32, %arg1: i32) -> (i32, i32, i32) {
    %c0_i32 = arith.constant 0 : i32
    %c0_i32_0 = arith.constant 0 : i32
    %c0_i32_1 = arith.constant 0 : i32
    return %arg1, %c0_i32, %c0_i32_0 : i32, i32, i32
  }
  func.func @transform_6(%arg0: i32, %arg1: i32) -> (i32, i32, i32) {
    %c0_i32 = arith.constant 0 : i32
    %c0_i32_0 = arith.constant 0 : i32
    %c0_i32_1 = arith.constant 0 : i32
    return %arg1, %c0_i32, %c0_i32_0 : i32, i32, i32
  }
  func.func @transform_7(%arg0: i32, %arg1: i32) -> (i32, i32, i32) {
    %c0_i32 = arith.constant 0 : i32
    %c0_i32_0 = arith.constant 0 : i32
    %c0_i32_1 = arith.constant 0 : i32
    return %arg1, %c0_i32, %c0_i32_0 : i32, i32, i32
  }
  func.func @transform_8(%arg0: i32, %arg1: i32) -> (i32, i32, i32) {
    %c0_i32 = arith.constant 0 : i32
    %c0_i32_0 = arith.constant 0 : i32
    %c0_i32_1 = arith.constant 0 : i32
    return %arg1, %c0_i32, %c0_i32_0 : i32, i32, i32
  }
  func.func @transform_9(%arg0: i32, %arg1: i32) -> (i32, i32, i32) {
    %c0_i32 = arith.constant 0 : i32
    %c0_i32_0 = arith.constant 0 : i32
    %c0_i32_1 = arith.constant 0 : i32
    return %arg1, %c0_i32, %c0_i32_0 : i32, i32, i32
  }
  func.func @transform_10(%arg0: i32, %arg1: i32) -> (i32, i32, i32) {
    %c0_i32 = arith.constant 0 : i32
    %c0_i32_0 = arith.constant 0 : i32
    %c0_i32_1 = arith.constant 0 : i32
    return %arg1, %c0_i32, %c0_i32_0 : i32, i32, i32
  }
  func.func @transform_11(%arg0: i32, %arg1: i32) -> (i32, i32, i32) {
    %c0_i32 = arith.constant 0 : i32
    %c0_i32_0 = arith.constant 0 : i32
    %c0_i32_1 = arith.constant 0 : i32
    return %arg1, %c0_i32, %c0_i32_0 : i32, i32, i32
  }
  func.func @transform_12(%arg0: i32, %arg1: i32) -> (i32, i32, i32) {
    %c0_i32 = arith.constant 0 : i32
    %c0_i32_0 = arith.constant 0 : i32
    %c0_i32_1 = arith.constant 0 : i32
    return %arg1, %c0_i32, %c0_i32_0 : i32, i32, i32
  }
  func.func @transform_13(%arg0: i32, %arg1: i32) -> (i32, i32, i32) {
    %c0_i32 = arith.constant 0 : i32
    %c0_i32_0 = arith.constant 0 : i32
    %c0_i32_1 = arith.constant 0 : i32
    return %arg1, %c0_i32, %c0_i32_0 : i32, i32, i32
  }
  func.func @transform_14(%arg0: i32, %arg1: i32) -> (i32, i32) {
    %c0_i32 = arith.constant 0 : i32
    %c0_i32_0 = arith.constant 0 : i32
    %c0_i32_1 = arith.constant 0 : i32
    return %c0_i32, %c0_i32_0 : i32, i32
  }
  func.func @transform_15(%arg0: i32, %arg1: i32) -> (i32, i32) {
    %c0_i32 = arith.constant 0 : i32
    %c0_i32_0 = arith.constant 0 : i32
    %c0_i32_1 = arith.constant 0 : i32
    return %c0_i32, %c0_i32_0 : i32, i32
  }
  func.func @transform_16(%arg0: i32, %arg1: i32) -> (i32, i32, i32) {
    %c0_i32 = arith.constant 0 : i32
    %c0_i32_0 = arith.constant 0 : i32
    %c0_i32_1 = arith.constant 0 : i32
    return %arg0, %c0_i32, %c0_i32_0 : i32, i32, i32
  }
}

</mosaic_0001>

<llo_original>
// kernel: tpu_custom_call.1
$region0: #{tpu_custom_call.1}
  #allocation0 [shape = 'u32[]', space=smem, size = 0x4, offset = 0x4, fixed_abs, tag = 'smem constant byte address 0x4 - core index']
  #allocation1 [shape = 'u32[144,128]{1,0:T(1,128)}', space=vmem, size = 0x12000, scoped, tag = 'internal scratch']
  #allocation2 [shape = 'f32[16,32]{1,0:T(8,128)}', space=vmem, size = 0x2000, scoped, tag = 'scratch operand']
  %s0 = inlined_call_operand.hbm [shape: f32[16,32], index: 0, kind: input, shape index: {}]
  %s1 = inlined_call_operand.vmem [shape: f32[1,2,16], index: 1, kind: input, shape index: {}]
  %s2 = inlined_call_operand.vmem [shape: f32[2,1,32], index: 2, kind: input, shape index: {}]
  %s3 = inlined_call_operand.vmem [shape: f32[2,1,32], index: 3, kind: input, shape index: {}]
  %s4 = inlined_call_operand.vmem [shape: bf16[2,32,96], index: 4, kind: input, shape index: {}]
  %s5 = inlined_call_operand.vmem [shape: f32[2,1,96], index: 5, kind: input, shape index: {}]
  %s6 = inlined_call_operand.vmem [shape: bf16[2,32,32], index: 6, kind: input, shape index: {}]
  %s7 = inlined_call_operand.vmem [shape: f32[2,1,32], index: 7, kind: input, shape index: {}]
  %s8 = inlined_call_operand.vmem [shape: f32[2,1,32], index: 8, kind: input, shape index: {}]
  %s9 = inlined_call_operand.hbm [shape: f32[2,1,32], index: 9, kind: input, shape index: {}]
  %s10 = inlined_call_operand.vmem [shape: bf16[2,32,64], index: 10, kind: input, shape index: {}]
  %s11 = inlined_call_operand.hbm [shape: f32[2,1,64], index: 11, kind: input, shape index: {}]
  %s12 = inlined_call_operand.vmem [shape: bf16[2,64,32], index: 12, kind: input, shape index: {}]
  %s13 = inlined_call_operand.vmem [shape: f32[2,1,32], index: 13, kind: input, shape index: {}]
  %s14 = inlined_call_operand.hbm [shape: f32[32,128], index: 14, kind: input, shape index: {}]
  %s15 = inlined_call_operand.vmem [shape: f32[1,128], index: 15, kind: input, shape index: {}]
  %s16 = inlined_call_operand.hbm [shape: f32[1,2,128], index: 16, kind: output, shape index: {}]
  %s17 = sld [smem:[#allocation0]]
  $region121: #{tpu_custom_call.1} parent=0
    _
  %s19 = ssub.s32 1, %s17
  %s20 = scalar_select 0, %s19, %s17
  $region1: #{tpu_custom_call.1} parent=0
    #allocation3 [shape = 'u8[8192]{0}', space=vmem, size = 0x2000, scoped, tag = 'input window, operand 0, single buffered']
    #allocation4 [shape = 's32[2]{0}', space=sflag, size = 0x8, scoped, tag = 'scoped memory for tpu_custom_call.1']
    #allocation5 [shape = 's32[2]{0}', space=sflag, size = 0x8, scoped, tag = 'scoped memory for tpu_custom_call.1']
    #allocation6 [shape = 'u8[1024]{0}', space=vmem, size = 0x400, scoped, tag = 'input window, operand 9']
    #allocation7 [shape = 's32[2]{0}', space=sflag, size = 0x8, scoped, tag = 'scoped memory for tpu_custom_call.1']
    #allocation8 [shape = 'u8[1024]{0}', space=vmem, size = 0x400, scoped, tag = 'input window, operand 11']
    #allocation9 [shape = 'u8[16384]{0}', space=vmem, size = 0x4000, scoped, tag = 'input window, operand 14, single buffered']
    #allocation10 [shape = 's32[1]{0}', space=sflag, size = 0x4, scoped, tag = 'scoped memory for tpu_custom_call.1']
    #allocation11 [shape = 'u8[1024]{0}', space=vmem, size = 0x400, scoped, tag = 'output window, operand 0, single buffered']
    %21 = vsyncpa [#allocation4], 0
    %22 = vsyncpa [#allocation7], 0
    %s23 = scalar_lea.sflag [#allocation7], 1
    %24 = vsyncpa %s23, 0
    %25 = vsyncpa [#allocation10], 0
    %26 = vsyncpa [#allocation5], 0
    loop: start=0, step=1, limit=4
    $region2: #{tpu_custom_call.1} parent=1 // loop_pre_header
      _
    $region3: #{tpu_custom_call.1} parent=1 // loop_header
      %s28 = sphi 0, %s32
      %p29 = scmp.ge.s32.totalorder %s28, 4
      %s35 = sphi 0, %s47
      %s36 = sphi 0, %s43
      %s37 = sphi 0, %s35
      %s38 = sphi 0, %s36
      %s39 = sphi 0, %s37
      %s40 = sphi 0, %s38
      %s50 = sphi 0, %s52
      %s53 = sphi 0, %s50
      %s54 = sphi 0, %s53
      %s70 = sphi 0, %s54
      %s76 = sphi 0, %s78
      %s79 = sphi 0, %s76
      %s80 = sphi 0, %s79
      %s96 = sphi 0, %s80
      %s102 = sphi 0, %s104
      %s105 = sphi 0, %s102
      %s106 = sphi 0, %s105
      %s122 = sphi 0, %s106
      %s128 = sphi 0, %s130
      %s131 = sphi 0, %s128
      %s132 = sphi 0, %s131
      %s148 = sphi 0, %s132
      %s154 = sphi 0, %s156
      %s157 = sphi 0, %s154
      %s158 = sphi 0, %s157
      %s174 = sphi 0, %s158
      %s180 = sphi 0, %s182
      %s183 = sphi 0, %s180
      %s184 = sphi 0, %s183
      %s200 = sphi 0, %s184
      %s206 = sphi 0, %s208
      %s209 = sphi 0, %s206
      %s210 = sphi 0, %s209
      %s226 = sphi 0, %s210
      %s232 = sphi 0, %s234
      %s235 = sphi 0, %s232
      %s236 = sphi 0, %s235
      %s252 = sphi 0, %s236
      %s258 = sphi 0, %s260
      %s261 = sphi 0, %s258
      %s262 = sphi 0, %s261
      %s278 = sphi 0, %s262
      %s284 = sphi 0, %s286
      %s287 = sphi 0, %s284
      %s288 = sphi 0, %s287
      %s304 = sphi 0, %s288
      %s310 = sphi 0, %s312
      %s313 = sphi 0, %s310
      %s314 = sphi 0, %s313
      %s330 = sphi 0, %s314
      %s336 = sphi 0, %s338
      %s339 = sphi 0, %s336
      %s340 = sphi 0, %s339
      %s356 = sphi 0, %s340
      %s362 = sphi 0, %s364
      %s365 = sphi 0, %s362
      %s366 = sphi 0, %s365
      %s382 = sphi 0, %s366
      %s388 = sphi 0, %s390
      %s391 = sphi 0, %s388
      %s392 = sphi 0, %s391
      %s408 = sphi 0, %s392
      %s412 = sphi 0, %s412
      %s414 = sphi 0, %s412
      %s415 = sphi 0, %s414
      %s429 = sphi 0, %s415
      %s433 = sphi 0, %s433
      %s435 = sphi 0, %s433
      %s436 = sphi 0, %s435
      %s450 = sphi 0, %s436
      %s456 = sphi 0, %s458
      %s459 = sphi 0, %s456
      %s460 = sphi 0, %s459
      %s476 = sphi 0, %s460
    $region4: #{tpu_custom_call.1} parent=1 // loop_header_branch
      %31 = sbr.rel (%p29) target = $region8
    $region5: #{tpu_custom_call.1} parent=1 // loop_body
      %s33 = ssub.s32 %s28, 1
      %s34 = ssub.s32 %s28, 2
      %s41 = sadd.s32 1, %s36
      %p42 = scmp.ge.s32.totalorder %s41, 2
      %s43 = scalar_select %p42, 0, %s41
      %s44 = sadd.s32 1, %s35
      %s45 = scalar_select %p42, %s44, %s35
      %p46 = scmp.ge.s32.totalorder %s45, 1
      %s47 = scalar_select %p46, 0, %s45
      %s48 = ssub.s32 %s35, %s47
      %p49 = scmp.eq.s32.totalorder %s48, 0
      %s51 = sadd.s32 %s50, 1
      %s52 = scalar_select %p49, %s50, %s51
      %p55 = pneg %p49
      %p56 = scmp.eq.s32.totalorder %s28, 1
      %p57 = por %p55, %p56
      %p58 = scmp.ne.s32.totalorder %s50, %s53
      %p59 = scmp.eq.s32.totalorder %s28, 0
      %p60 = por %p58, %p59
      %p61 = scmp.ne.s32.totalorder %s50, %s53
      %p62 = scmp.eq.s32.totalorder %s33, 1
      %p63 = por %p61, %p62
      %p64 = scmp.ne.s32.totalorder %s53, %s54
      %p65 = scmp.eq.s32.totalorder %s33, 0
      %p66 = por %p64, %p65
      %p67 = scmp.ne.s32.totalorder %s53, %s54
      %p68 = scmp.eq.s32.totalorder %s34, 1
      %p69 = por %p67, %p68
      %p71 = scmp.ne.s32.totalorder %s54, %s70
      %p72 = scmp.eq.s32.totalorder %s34, 0
      %p73 = por %p71, %p72
      %s74 = ssub.s32 %s35, %s47
      %p75 = scmp.eq.s32.totalorder %s74, 0
      %s77 = sadd.s32 %s76, 1
      %s78 = scalar_select %p75, %s76, %s77
      %p81 = pneg %p75
      %p82 = scmp.eq.s32.totalorder %s28, 1
      %p83 = por %p81, %p82
      %p84 = scmp.ne.s32.totalorder %s76, %s79
      %p85 = scmp.eq.s32.totalorder %s28, 0
      %p86 = por %p84, %p85
      %p87 = scmp.ne.s32.totalorder %s76, %s79
      %p88 = scmp.eq.s32.totalorder %s33, 1
      %p89 = por %p87, %p88
      %p90 = scmp.ne.s32.totalorder %s79, %s80
      %p91 = scmp.eq.s32.totalorder %s33, 0
      %p92 = por %p90, %p91
      %p93 = scmp.ne.s32.totalorder %s79, %s80
      %p94 = scmp.eq.s32.totalorder %s34, 1
      %p95 = por %p93, %p94
      %p97 = scmp.ne.s32.totalorder %s80, %s96
      %p98 = scmp.eq.s32.totalorder %s34, 0
      %p99 = por %p97, %p98
      %s100 = ssub.s32 %s36, %s43
      %p101 = scmp.eq.s32.totalorder %s100, 0
      %s103 = sadd.s32 %s102, 1
      %s104 = scalar_select %p101, %s102, %s103
      %p107 = pneg %p101
      %p108 = scmp.eq.s32.totalorder %s28, 1
      %p109 = por %p107, %p108
      %p110 = scmp.ne.s32.totalorder %s102, %s105
      %p111 = scmp.eq.s32.totalorder %s28, 0
      %p112 = por %p110, %p111
      %p113 = scmp.ne.s32.totalorder %s102, %s105
      %p114 = scmp.eq.s32.totalorder %s33, 1
      %p115 = por %p113, %p114
      %p116 = scmp.ne.s32.totalorder %s105, %s106
      %p117 = scmp.eq.s32.totalorder %s33, 0
      %p118 = por %p116, %p117
      %p119 = scmp.ne.s32.totalorder %s105, %s106
      %p120 = scmp.eq.s32.totalorder %s34, 1
      %p121 = por %p119, %p120
      %p123 = scmp.ne.s32.totalorder %s106, %s122
      %p124 = scmp.eq.s32.totalorder %s34, 0
      %p125 = por %p123, %p124
      %s126 = ssub.s32 %s36, %s43
      %p127 = scmp.eq.s32.totalorder %s126, 0
      %s129 = sadd.s32 %s128, 1
      %s130 = scalar_select %p127, %s128, %s129
      %p133 = pneg %p127
      %p134 = scmp.eq.s32.totalorder %s28, 1
      %p135 = por %p133, %p134
      %p136 = scmp.ne.s32.totalorder %s128, %s131
      %p137 = scmp.eq.s32.totalorder %s28, 0
      %p138 = por %p136, %p137
      %p139 = scmp.ne.s32.totalorder %s128, %s131
      %p140 = scmp.eq.s32.totalorder %s33, 1
      %p141 = por %p139, %p140
      %p142 = scmp.ne.s32.totalorder %s131, %s132
      %p143 = scmp.eq.s32.totalorder %s33, 0
      %p144 = por %p142, %p143
      %p145 = scmp.ne.s32.totalorder %s131, %s132
      %p146 = scmp.eq.s32.totalorder %s34, 1
      %p147 = por %p145, %p146
      %p149 = scmp.ne.s32.totalorder %s132, %s148
      %p150 = scmp.eq.s32.totalorder %s34, 0
      %p151 = por %p149, %p150
      %s152 = ssub.s32 %s36, %s43
      %p153 = scmp.eq.s32.totalorder %s152, 0
      %s155 = sadd.s32 %s154, 1
      %s156 = scalar_select %p153, %s154, %s155
      %p159 = pneg %p153
      %p160 = scmp.eq.s32.totalorder %s28, 1
      %p161 = por %p159, %p160
      %p162 = scmp.ne.s32.totalorder %s154, %s157
      %p163 = scmp.eq.s32.totalorder %s28, 0
      %p164 = por %p162, %p163
      %p165 = scmp.ne.s32.totalorder %s154, %s157
      %p166 = scmp.eq.s32.totalorder %s33, 1
      %p167 = por %p165, %p166
      %p168 = scmp.ne.s32.totalorder %s157, %s158
      %p169 = scmp.eq.s32.totalorder %s33, 0
      %p170 = por %p168, %p169
      %p171 = scmp.ne.s32.totalorder %s157, %s158
      %p172 = scmp.eq.s32.totalorder %s34, 1
      %p173 = por %p171, %p172
      %p175 = scmp.ne.s32.totalorder %s158, %s174
      %p176 = scmp.eq.s32.totalorder %s34, 0
      %p177 = por %p175, %p176
      %s178 = ssub.s32 %s36, %s43
      %p179 = scmp.eq.s32.totalorder %s178, 0
      %s181 = sadd.s32 %s180, 1
      %s182 = scalar_select %p179, %s180, %s181
      %p185 = pneg %p179
      %p186 = scmp.eq.s32.totalorder %s28, 1
      %p187 = por %p185, %p186
      %p188 = scmp.ne.s32.totalorder %s180, %s183
      %p189 = scmp.eq.s32.totalorder %s28, 0
      %p190 = por %p188, %p189
      %p191 = scmp.ne.s32.totalorder %s180, %s183
      %p192 = scmp.eq.s32.totalorder %s33, 1
      %p193 = por %p191, %p192
      %p194 = scmp.ne.s32.totalorder %s183, %s184
      %p195 = scmp.eq.s32.totalorder %s33, 0
      %p196 = por %p194, %p195
      %p197 = scmp.ne.s32.totalorder %s183, %s184
      %p198 = scmp.eq.s32.totalorder %s34, 1
      %p199 = por %p197, %p198
      %p201 = scmp.ne.s32.totalorder %s184, %s200
      %p202 = scmp.eq.s32.totalorder %s34, 0
      %p203 = por %p201, %p202
      %s204 = ssub.s32 %s36, %s43
      %p205 = scmp.eq.s32.totalorder %s204, 0
      %s207 = sadd.s32 %s206, 1
      %s208 = scalar_select %p205, %s206, %s207
      %p211 = pneg %p205
      %p212 = scmp.eq.s32.totalorder %s28, 1
      %p213 = por %p211, %p212
      %p214 = scmp.ne.s32.totalorder %s206, %s209
      %p215 = scmp.eq.s32.totalorder %s28, 0
      %p216 = por %p214, %p215
      %p217 = scmp.ne.s32.totalorder %s206, %s209
      %p218 = scmp.eq.s32.totalorder %s33, 1
      %p219 = por %p217, %p218
      %p220 = scmp.ne.s32.totalorder %s209, %s210
      %p221 = scmp.eq.s32.totalorder %s33, 0
      %p222 = por %p220, %p221
      %p223 = scmp.ne.s32.totalorder %s209, %s210
      %p224 = scmp.eq.s32.totalorder %s34, 1
      %p225 = por %p223, %p224
      %p227 = scmp.ne.s32.totalorder %s210, %s226
      %p228 = scmp.eq.s32.totalorder %s34, 0
      %p229 = por %p227, %p228
      %s230 = ssub.s32 %s36, %s43
      %p231 = scmp.eq.s32.totalorder %s230, 0
      %s233 = sadd.s32 %s232, 1
      %s234 = scalar_select %p231, %s232, %s233
      %p237 = pneg %p231
      %p238 = scmp.eq.s32.totalorder %s28, 1
      %p239 = por %p237, %p238
      %p240 = scmp.ne.s32.totalorder %s232, %s235
      %p241 = scmp.eq.s32.totalorder %s28, 0
      %p242 = por %p240, %p241
      %p243 = scmp.ne.s32.totalorder %s232, %s235
      %p244 = scmp.eq.s32.totalorder %s33, 1
      %p245 = por %p243, %p244
      %p246 = scmp.ne.s32.totalorder %s235, %s236
      %p247 = scmp.eq.s32.totalorder %s33, 0
      %p248 = por %p246, %p247
      %p249 = scmp.ne.s32.totalorder %s235, %s236
      %p250 = scmp.eq.s32.totalorder %s34, 1
      %p251 = por %p249, %p250
      %p253 = scmp.ne.s32.totalorder %s236, %s252
      %p254 = scmp.eq.s32.totalorder %s34, 0
      %p255 = por %p253, %p254
      %s256 = ssub.s32 %s36, %s43
      %p257 = scmp.eq.s32.totalorder %s256, 0
      %s259 = sadd.s32 %s258, 1
      %s260 = scalar_select %p257, %s258, %s259
      %p263 = pneg %p257
      %p264 = scmp.eq.s32.totalorder %s28, 1
      %p265 = por %p263, %p264
      %p266 = scmp.ne.s32.totalorder %s258, %s261
      %p267 = scmp.eq.s32.totalorder %s28, 0
      %p268 = por %p266, %p267
      %p269 = scmp.ne.s32.totalorder %s258, %s261
      %p270 = scmp.eq.s32.totalorder %s33, 1
      %p271 = por %p269, %p270
      %p272 = scmp.ne.s32.totalorder %s261, %s262
      %p273 = scmp.eq.s32.totalorder %s33, 0
      %p274 = por %p272, %p273
      %p275 = scmp.ne.s32.totalorder %s261, %s262
      %p276 = scmp.eq.s32.totalorder %s34, 1
      %p277 = por %p275, %p276
      %p279 = scmp.ne.s32.totalorder %s262, %s278
      %p280 = scmp.eq.s32.totalorder %s34, 0
      %p281 = por %p279, %p280
      %s282 = ssub.s32 %s36, %s43
      %p283 = scmp.eq.s32.totalorder %s282, 0
      %s285 = sadd.s32 %s284, 1
      %s286 = scalar_select %p283, %s284, %s285
      %p289 = pneg %p283
      %p290 = scmp.eq.s32.totalorder %s28, 1
      %p291 = por %p289, %p290
      %p292 = scmp.ne.s32.totalorder %s284, %s287
      %p293 = scmp.eq.s32.totalorder %s28, 0
      %p294 = por %p292, %p293
      %p295 = scmp.ne.s32.totalorder %s284, %s287
      %p296 = scmp.eq.s32.totalorder %s33, 1
      %p297 = por %p295, %p296
      %p298 = scmp.ne.s32.totalorder %s287, %s288
      %p299 = scmp.eq.s32.totalorder %s33, 0
      %p300 = por %p298, %p299
      %p301 = scmp.ne.s32.totalorder %s287, %s288
      %p302 = scmp.eq.s32.totalorder %s34, 1
      %p303 = por %p301, %p302
      %p305 = scmp.ne.s32.totalorder %s288, %s304
      %p306 = scmp.eq.s32.totalorder %s34, 0
      %p307 = por %p305, %p306
      %s308 = ssub.s32 %s36, %s43
      %p309 = scmp.eq.s32.totalorder %s308, 0
      %s311 = sadd.s32 %s310, 1
      %s312 = scalar_select %p309, %s310, %s311
      %p315 = pneg %p309
      %p316 = scmp.eq.s32.totalorder %s28, 1
      %p317 = por %p315, %p316
      %p318 = scmp.ne.s32.totalorder %s310, %s313
      %p319 = scmp.eq.s32.totalorder %s28, 0
      %p320 = por %p318, %p319
      %p321 = scmp.ne.s32.totalorder %s310, %s313
      %p322 = scmp.eq.s32.totalorder %s33, 1
      %p323 = por %p321, %p322
      %p324 = scmp.ne.s32.totalorder %s313, %s314
      %p325 = scmp.eq.s32.totalorder %s33, 0
      %p326 = por %p324, %p325
      %p327 = scmp.ne.s32.totalorder %s313, %s314
      %p328 = scmp.eq.s32.totalorder %s34, 1
      %p329 = por %p327, %p328
      %p331 = scmp.ne.s32.totalorder %s314, %s330
      %p332 = scmp.eq.s32.totalorder %s34, 0
      %p333 = por %p331, %p332
      %s334 = ssub.s32 %s36, %s43
      %p335 = scmp.eq.s32.totalorder %s334, 0
      %s337 = sadd.s32 %s336, 1
      %s338 = scalar_select %p335, %s336, %s337
      %p341 = pneg %p335
      %p342 = scmp.eq.s32.totalorder %s28, 1
      %p343 = por %p341, %p342
      %p344 = scmp.ne.s32.totalorder %s336, %s339
      %p345 = scmp.eq.s32.totalorder %s28, 0
      %p346 = por %p344, %p345
      %p347 = scmp.ne.s32.totalorder %s336, %s339
      %p348 = scmp.eq.s32.totalorder %s33, 1
      %p349 = por %p347, %p348
      %p350 = scmp.ne.s32.totalorder %s339, %s340
      %p351 = scmp.eq.s32.totalorder %s33, 0
      %p352 = por %p350, %p351
      %p353 = scmp.ne.s32.totalorder %s339, %s340
      %p354 = scmp.eq.s32.totalorder %s34, 1
      %p355 = por %p353, %p354
      %p357 = scmp.ne.s32.totalorder %s340, %s356
      %p358 = scmp.eq.s32.totalorder %s34, 0
      %p359 = por %p357, %p358
      %s360 = ssub.s32 %s36, %s43
      %p361 = scmp.eq.s32.totalorder %s360, 0
      %s363 = sadd.s32 %s362, 1
      %s364 = scalar_select %p361, %s362, %s363
      %p367 = pneg %p361
      %p368 = scmp.eq.s32.totalorder %s28, 1
      %p369 = por %p367, %p368
      %p370 = scmp.ne.s32.totalorder %s362, %s365
      %p371 = scmp.eq.s32.totalorder %s28, 0
      %p372 = por %p370, %p371
      %p373 = scmp.ne.s32.totalorder %s362, %s365
      %p374 = scmp.eq.s32.totalorder %s33, 1
      %p375 = por %p373, %p374
      %p376 = scmp.ne.s32.totalorder %s365, %s366
      %p377 = scmp.eq.s32.totalorder %s33, 0
      %p378 = por %p376, %p377
      %p379 = scmp.ne.s32.totalorder %s365, %s366
      %p380 = scmp.eq.s32.totalorder %s34, 1
      %p381 = por %p379, %p380
      %p383 = scmp.ne.s32.totalorder %s366, %s382
      %p384 = scmp.eq.s32.totalorder %s34, 0
      %p385 = por %p383, %p384
      %s386 = ssub.s32 %s36, %s43
      %p387 = scmp.eq.s32.totalorder %s386, 0
      %s389 = sadd.s32 %s388, 1
      %s390 = scalar_select %p387, %s388, %s389
      %p393 = pneg %p387
      %p394 = scmp.eq.s32.totalorder %s28, 1
      %p395 = por %p393, %p394
      %p396 = scmp.ne.s32.totalorder %s388, %s391
      %p397 = scmp.eq.s32.totalorder %s28, 0
      %p398 = por %p396, %p397
      %p399 = scmp.ne.s32.totalorder %s388, %s391
      %p400 = scmp.eq.s32.totalorder %s33, 1
      %p401 = por %p399, %p400
      %p402 = scmp.ne.s32.totalorder %s391, %s392
      %p403 = scmp.eq.s32.totalorder %s33, 0
      %p404 = por %p402, %p403
      %p405 = scmp.ne.s32.totalorder %s391, %s392
      %p406 = scmp.eq.s32.totalorder %s34, 1
      %p407 = por %p405, %p406
      %p409 = scmp.ne.s32.totalorder %s392, %s408
      %p410 = scmp.eq.s32.totalorder %s34, 0
      %p411 = por %p409, %p410
      %s413 = sadd.s32 %s412, 1
      %p416 = scmp.eq.s32.totalorder %s28, 1
      %p417 = scmp.ne.s32.totalorder %s412, %s414
      %p418 = scmp.eq.s32.totalorder %s28, 0
      %p419 = por %p417, %p418
      %p420 = scmp.ne.s32.totalorder %s412, %s414
      %p421 = scmp.eq.s32.totalorder %s33, 1
      %p422 = por %p420, %p421
      %p423 = scmp.ne.s32.totalorder %s414, %s415
      %p424 = scmp.eq.s32.totalorder %s33, 0
      %p425 = por %p423, %p424
      %p426 = scmp.ne.s32.totalorder %s414, %s415
      %p427 = scmp.eq.s32.totalorder %s34, 1
      %p428 = por %p426, %p427
      %p430 = scmp.ne.s32.totalorder %s415, %s429
      %p431 = scmp.eq.s32.totalorder %s34, 0
      %p432 = por %p430, %p431
      %s434 = sadd.s32 %s433, 1
      %p437 = scmp.eq.s32.totalorder %s28, 1
      %p438 = scmp.ne.s32.totalorder %s433, %s435
      %p439 = scmp.eq.s32.totalorder %s28, 0
      %p440 = por %p438, %p439
      %p441 = scmp.ne.s32.totalorder %s433, %s435
      %p442 = scmp.eq.s32.totalorder %s33, 1
      %p443 = por %p441, %p442
      %p444 = scmp.ne.s32.totalorder %s435, %s436
      %p445 = scmp.eq.s32.totalorder %s33, 0
      %p446 = por %p444, %p445
      %p447 = scmp.ne.s32.totalorder %s435, %s436
      %p448 = scmp.eq.s32.totalorder %s34, 1
      %p449 = por %p447, %p448
      %p451 = scmp.ne.s32.totalorder %s436, %s450
      %p452 = scmp.eq.s32.totalorder %s34, 0
      %p453 = por %p451, %p452
      %s454 = ssub.s32 %s35, %s47
      %p455 = scmp.eq.s32.totalorder %s454, 0
      %s457 = sadd.s32 %s456, 1
      %s458 = scalar_select %p455, %s456, %s457
      %p461 = pneg %p455
      %p462 = scmp.eq.s32.totalorder %s28, 1
      %p463 = por %p461, %p462
      %p464 = scmp.ne.s32.totalorder %s456, %s459
      %p465 = scmp.eq.s32.totalorder %s28, 0
      %p466 = por %p464, %p465
      %p467 = scmp.ne.s32.totalorder %s456, %s459
      %p468 = scmp.eq.s32.totalorder %s33, 1
      %p469 = por %p467, %p468
      %p470 = scmp.ne.s32.totalorder %s459, %s460
      %p471 = scmp.eq.s32.totalorder %s33, 0
      %p472 = por %p470, %p471
      %p473 = scmp.ne.s32.totalorder %s459, %s460
      %p474 = scmp.eq.s32.totalorder %s34, 1
      %p475 = por %p473, %p474
      %p477 = scmp.ne.s32.totalorder %s460, %s476
      %p478 = scmp.eq.s32.totalorder %s34, 0
      %p479 = por %p477, %p478
      %p480 = scmp.le.s32.totalorder 1, %s28
      %p481 = scmp.lt.s32.totalorder %s28, 3
      %p482 = pnand %p480, %p481
      %p483 = pneg %p482
      // Predicated region
      $region9: #{tpu_custom_call.1} parent=5 // pred_check
        _
      $region10: #{tpu_custom_call.1} parent=5 // pred_check_branch
        %485 = sbr.rel (%p482) target = $region12
      $region11: #{tpu_custom_call.1} parent=5 // pred_region
        %s486 = ssub.s32 %s28, 1
        // Predicated region
        $region13: #{tpu_custom_call.1} parent=11 // pred_check
          %p487 = pneg %p66
        $region14: #{tpu_custom_call.1} parent=11 // pred_check_branch
          %489 = sbr.rel (%p487) target = $region16
        $region15: #{tpu_custom_call.1} parent=11 // pred_region
          %s490 = smul.u32 2, %s37
          %s492 = ssub.s32 256, 256
          %493 = vsyncadd [#allocation4], %s492
          %s494 = smul.addr %s490, 128
          %s495 = scalar_lea.hbm %s0, %s494
          %s496 = sshll.u32 [#allocation3], 4
          %s497 = int_to_ptr.vmem [resolvable:$true] %s496
          %502 = dma.hbm_to_vmem [thread:$0]  %s495, 256, %s497, [#allocation4], 128, 128, 8
        $region16: #{tpu_custom_call.1} parent=11 // pred_fallthru
          _
        // Predicated region
        $region17: #{tpu_custom_call.1} parent=11 // pred_check
          %p503 = pneg %p92
        $region18: #{tpu_custom_call.1} parent=11 // pred_check_branch
          %505 = sbr.rel (%p503) target = $region20
        $region19: #{tpu_custom_call.1} parent=11 // pred_region
          %p506 = scmp.lt.s32.totalorder %s37, 0
          %s507 = scalar_select %p506, %s37, 0
          %s508 = smul.addr %s507, 2
          %s509 = scalar_lea.vmem %s1, %s508
        $region20: #{tpu_custom_call.1} parent=11 // pred_fallthru
          _
        // Predicated region
        $region21: #{tpu_custom_call.1} parent=11 // pred_check
          %p510 = pneg %p425
        $region22: #{tpu_custom_call.1} parent=11 // pred_check_branch
          %512 = sbr.rel (%p510) target = $region24
        $region23: #{tpu_custom_call.1} parent=11 // pred_region
          %s514 = ssub.s32 512, 512
          %515 = vsyncadd [#allocation10], %s514
          %s516 = sshll.u32 [#allocation9], 4
          %s517 = int_to_ptr.vmem [resolvable:$true] %s516
          %522 = dma.hbm_to_vmem [thread:$0]  %s14, 512, %s517, [#allocation10], 128, 128, 8
        $region24: #{tpu_custom_call.1} parent=11 // pred_fallthru
          _
        // Predicated region
        $region25: #{tpu_custom_call.1} parent=11 // pred_check
          %p523 = pneg %p446
        $region26: #{tpu_custom_call.1} parent=11 // pred_check_branch
          %525 = sbr.rel (%p523) target = $region28
        $region27: #{tpu_custom_call.1} parent=11 // pred_region
          _
        $region28: #{tpu_custom_call.1} parent=11 // pred_fallthru
          _
      $region12: #{tpu_custom_call.1} parent=5 // pred_fallthru
        _
      %p526 = scmp.lt.s32.totalorder %s28, 2
      // Predicated region
      $region29: #{tpu_custom_call.1} parent=5 // pred_check
        %p527 = pneg %p526
      $region30: #{tpu_custom_call.1} parent=5 // pred_check_branch
        %529 = sbr.rel (%p527) target = $region32
      $region31: #{tpu_custom_call.1} parent=5 // pred_region
        // Predicated region
        $region33: #{tpu_custom_call.1} parent=31 // pred_check
          %p530 = pneg %p112
        $region34: #{tpu_custom_call.1} parent=31 // pred_check_branch
          %532 = sbr.rel (%p530) target = $region36
        $region35: #{tpu_custom_call.1} parent=31 // pred_region
          %p533 = scmp.lt.s32.totalorder %s36, 1
          %s534 = scalar_select %p533, %s36, 1
          %s535 = scalar_lea.vmem %s2, %s534
        $region36: #{tpu_custom_call.1} parent=31 // pred_fallthru
          _
        // Predicated region
        $region37: #{tpu_custom_call.1} parent=31 // pred_check
          %p536 = pneg %p138
        $region38: #{tpu_custom_call.1} parent=31 // pred_check_branch
          %538 = sbr.rel (%p536) target = $region40
        $region39: #{tpu_custom_call.1} parent=31 // pred_region
          %p539 = scmp.lt.s32.totalorder %s36, 1
          %s540 = scalar_select %p539, %s36, 1
          %s541 = scalar_lea.vmem %s3, %s540
        $region40: #{tpu_custom_call.1} parent=31 // pred_fallthru
          _
        // Predicated region
        $region41: #{tpu_custom_call.1} parent=31 // pred_check
          %p542 = pneg %p164
        $region42: #{tpu_custom_call.1} parent=31 // pred_check_branch
          %544 = sbr.rel (%p542) target = $region44
        $region43: #{tpu_custom_call.1} parent=31 // pred_region
          %p545 = scmp.lt.s32.totalorder %s36, 1
          %s546 = scalar_select %p545, %s36, 1
          %s547 = smul.addr %s546, 4
          %s548 = smul.addr %s547, 4
          %s549 = scalar_lea.vmem %s4, %s548
        $region44: #{tpu_custom_call.1} parent=31 // pred_fallthru
          _
        // Predicated region
        $region45: #{tpu_custom_call.1} parent=31 // pred_check
          %p550 = pneg %p190
        $region46: #{tpu_custom_call.1} parent=31 // pred_check_branch
          %552 = sbr.rel (%p550) target = $region48
        $region47: #{tpu_custom_call.1} parent=31 // pred_region
          %p553 = scmp.lt.s32.totalorder %s36, 1
          %s554 = scalar_select %p553, %s36, 1
          %s555 = scalar_lea.vmem %s5, %s554
        $region48: #{tpu_custom_call.1} parent=31 // pred_fallthru
          _
        // Predicated region
        $region49: #{tpu_custom_call.1} parent=31 // pred_check
          %p556 = pneg %p216
        $region50: #{tpu_custom_call.1} parent=31 // pred_check_branch
          %558 = sbr.rel (%p556) target = $region52
        $region51: #{tpu_custom_call.1} parent=31 // pred_region
          %p559 = scmp.lt.s32.totalorder %s36, 1
          %s560 = scalar_select %p559, %s36, 1
          %s561 = smul.addr %s560, 4
          %s562 = smul.addr %s561, 4
          %s563 = scalar_lea.vmem %s6, %s562
        $region52: #{tpu_custom_call.1} parent=31 // pred_fallthru
          _
        // Predicated region
        $region53: #{tpu_custom_call.1} parent=31 // pred_check
          %p564 = pneg %p242
        $region54: #{tpu_custom_call.1} parent=31 // pred_check_branch
          %566 = sbr.rel (%p564) target = $region56
        $region55: #{tpu_custom_call.1} parent=31 // pred_region
          %p567 = scmp.lt.s32.totalorder %s36, 1
          %s568 = scalar_select %p567, %s36, 1
          %s569 = scalar_lea.vmem %s7, %s568
        $region56: #{tpu_custom_call.1} parent=31 // pred_fallthru
          _
        // Predicated region
        $region57: #{tpu_custom_call.1} parent=31 // pred_check
          %p570 = pneg %p268
        $region58: #{tpu_custom_call.1} parent=31 // pred_check_branch
          %572 = sbr.rel (%p570) target = $region60
        $region59: #{tpu_custom_call.1} parent=31 // pred_region
          %p573 = scmp.lt.s32.totalorder %s36, 1
          %s574 = scalar_select %p573, %s36, 1
          %s575 = scalar_lea.vmem %s8, %s574
        $region60: #{tpu_custom_call.1} parent=31 // pred_fallthru
          _
        // Predicated region
        $region61: #{tpu_custom_call.1} parent=31 // pred_check
          %p576 = pneg %p294
        $region62: #{tpu_custom_call.1} parent=31 // pred_check_branch
          %578 = sbr.rel (%p576) target = $region64
        $region63: #{tpu_custom_call.1} parent=31 // pred_region
          %s579 = sand.u32 %s28, 1
          %s580 = scalar_lea.sflag [#allocation7], %s579
          %s581 = sand.u32 %s284, 1
          %s582 = scalar_lea.vmem [#allocation6], %s581
          %s584 = ssub.s32 16, 16
          %585 = vsyncadd %s580, %s584
          %s586 = smul.addr %s36, 16
          %s587 = scalar_lea.hbm %s9, %s586
          %s589 = sshll.u32 %s582, 4
          %s590 = int_to_ptr.vmem [resolvable:$true] %s589
          %592 = dma.hbm_to_vmem [thread:$0]  %s587, 16, %s590, %s580
        $region64: #{tpu_custom_call.1} parent=31 // pred_fallthru
          _
        // Predicated region
        $region65: #{tpu_custom_call.1} parent=31 // pred_check
          %p593 = pneg %p320
        $region66: #{tpu_custom_call.1} parent=31 // pred_check_branch
          %595 = sbr.rel (%p593) target = $region68
        $region67: #{tpu_custom_call.1} parent=31 // pred_region
          %p596 = scmp.lt.s32.totalorder %s36, 1
          %s597 = scalar_select %p596, %s36, 1
          %s598 = smul.addr %s597, 4
          %s599 = smul.addr %s598, 4
          %s600 = scalar_lea.vmem %s10, %s599
        $region68: #{tpu_custom_call.1} parent=31 // pred_fallthru
          _
        // Predicated region
        $region69: #{tpu_custom_call.1} parent=31 // pred_check
          %p601 = pneg %p346
        $region70: #{tpu_custom_call.1} parent=31 // pred_check_branch
          %603 = sbr.rel (%p601) target = $region72
        $region71: #{tpu_custom_call.1} parent=31 // pred_region
          %s604 = sand.u32 %s28, 1
          %s605 = scalar_lea.sflag [#allocation7], %s604
          %s606 = sand.u32 %s336, 1
          %s607 = scalar_lea.vmem [#allocation8], %s606
          %s609 = ssub.s32 16, 16
          %610 = vsyncadd %s605, %s609
          %s611 = smul.addr %s36, 16
          %s612 = scalar_lea.hbm %s11, %s611
          %s614 = sshll.u32 %s607, 4
          %s615 = int_to_ptr.vmem [resolvable:$true] %s614
          %617 = dma.hbm_to_vmem [thread:$0]  %s612, 16, %s615, %s605
        $region72: #{tpu_custom_call.1} parent=31 // pred_fallthru
          _
        // Predicated region
        $region73: #{tpu_custom_call.1} parent=31 // pred_check
          %p618 = pneg %p372
        $region74: #{tpu_custom_call.1} parent=31 // pred_check_branch
          %620 = sbr.rel (%p618) target = $region76
        $region75: #{tpu_custom_call.1} parent=31 // pred_region
          %p621 = scmp.lt.s32.totalorder %s36, 1
          %s622 = scalar_select %p621, %s36, 1
          %s623 = smul.addr %s622, 8
          %s624 = smul.addr %s623, 4
          %s625 = scalar_lea.vmem %s12, %s624
        $region76: #{tpu_custom_call.1} parent=31 // pred_fallthru
          _
        // Predicated region
        $region77: #{tpu_custom_call.1} parent=31 // pred_check
          %p626 = pneg %p398
        $region78: #{tpu_custom_call.1} parent=31 // pred_check_branch
          %628 = sbr.rel (%p626) target = $region80
        $region79: #{tpu_custom_call.1} parent=31 // pred_region
          %p629 = scmp.lt.s32.totalorder %s36, 1
          %s630 = scalar_select %p629, %s36, 1
          %s631 = scalar_lea.vmem %s13, %s630
        $region80: #{tpu_custom_call.1} parent=31 // pred_fallthru
          _
      $region32: #{tpu_custom_call.1} parent=5 // pred_fallthru
        _
      %p632 = scmp.le.s32.totalorder 1, %s28
      %p633 = scmp.lt.s32.totalorder %s28, 3
      %p634 = pnand %p632, %p633
      %p635 = pneg %p634
      // Predicated region
      $region81: #{tpu_custom_call.1} parent=5 // pred_check
        _
      $region82: #{tpu_custom_call.1} parent=5 // pred_check_branch
        %637 = sbr.rel (%p634) target = $region84
      $region83: #{tpu_custom_call.1} parent=5 // pred_region
        %s638 = ssub.s32 %s28, 1
        // Predicated region
        $region85: #{tpu_custom_call.1} parent=83 // pred_check
          %p639 = pneg %p66
        $region86: #{tpu_custom_call.1} parent=83 // pred_check_branch
          %641 = sbr.rel (%p639) target = $region88
        $region87: #{tpu_custom_call.1} parent=83 // pred_region
          %642 = dma.done [#allocation4], 256
        $region88: #{tpu_custom_call.1} parent=83 // pred_fallthru
          _
        %s643 = sand.u32 %s33, 1
        %s644 = scalar_lea.sflag [#allocation7], %s643
        %s645 = sand.u32 %s287, 1
        %s646 = scalar_lea.vmem [#allocation6], %s645
        // Predicated region
        $region89: #{tpu_custom_call.1} parent=83 // pred_check
          %p647 = pneg %p300
        $region90: #{tpu_custom_call.1} parent=83 // pred_check_branch
          %649 = sbr.rel (%p647) target = $region92
        $region91: #{tpu_custom_call.1} parent=83 // pred_region
          %650 = dma.done %s644, 16
        $region92: #{tpu_custom_call.1} parent=83 // pred_fallthru
          _
        %s651 = sand.u32 %s33, 1
        %s652 = scalar_lea.sflag [#allocation7], %s651
        %s653 = sand.u32 %s339, 1
        %s654 = scalar_lea.vmem [#allocation8], %s653
        // Predicated region
        $region93: #{tpu_custom_call.1} parent=83 // pred_check
          %p655 = pneg %p352
        $region94: #{tpu_custom_call.1} parent=83 // pred_check_branch
          %657 = sbr.rel (%p655) target = $region96
        $region95: #{tpu_custom_call.1} parent=83 // pred_region
          %658 = dma.done %s652, 16
        $region96: #{tpu_custom_call.1} parent=83 // pred_fallthru
          _
        // Predicated region
        $region97: #{tpu_custom_call.1} parent=83 // pred_check
          %p659 = pneg %p425
        $region98: #{tpu_custom_call.1} parent=83 // pred_check_branch
          %661 = sbr.rel (%p659) target = $region100
        $region99: #{tpu_custom_call.1} parent=83 // pred_region
          %662 = dma.done [#allocation10], 512
        $region100: #{tpu_custom_call.1} parent=83 // pred_fallthru
          _
        %p663 = pneg %p66
        %p664 = pneg %p63
        %p665 = scmp.lt.s32.totalorder %s37, 0
        %s666 = scalar_select %p665, %s37, 0
        %s667 = smul.addr %s666, 2
        %s668 = scalar_lea.vmem %s1, %s667
        %p669 = pneg %p92
        %p670 = pneg %p89
        %p671 = scmp.lt.s32.totalorder %s38, 1
        %s672 = scalar_select %p671, %s38, 1
        %s673 = scalar_lea.vmem %s2, %s672
        %p674 = pneg %p118
        %p675 = pneg %p115
        %p676 = scmp.lt.s32.totalorder %s38, 1
        %s677 = scalar_select %p676, %s38, 1
        %s678 = scalar_lea.vmem %s3, %s677
        %p679 = pneg %p144
        %p680 = pneg %p141
        %p681 = scmp.lt.s32.totalorder %s38, 1
        %s682 = scalar_select %p681, %s38, 1
        %s683 = smul.addr %s682, 4
        %s684 = smul.addr %s683, 4
        %s685 = scalar_lea.vmem %s4, %s684
        %p686 = pneg %p170
        %p687 = pneg %p167
        %p688 = scmp.lt.s32.totalorder %s38, 1
        %s689 = scalar_select %p688, %s38, 1
        %s690 = scalar_lea.vmem %s5, %s689
        %p691 = pneg %p196
        %p692 = pneg %p193
        %p693 = scmp.lt.s32.totalorder %s38, 1
        %s694 = scalar_select %p693, %s38, 1
        %s695 = smul.addr %s694, 4
        %s696 = smul.addr %s695, 4
        %s697 = scalar_lea.vmem %s6, %s696
        %p698 = pneg %p222
        %p699 = pneg %p219
        %p700 = scmp.lt.s32.totalorder %s38, 1
        %s701 = scalar_select %p700, %s38, 1
        %s702 = scalar_lea.vmem %s7, %s701
        %p703 = pneg %p248
        %p704 = pneg %p245
        %p705 = scmp.lt.s32.totalorder %s38, 1
        %s706 = scalar_select %p705, %s38, 1
        %s707 = scalar_lea.vmem %s8, %s706
        %p708 = pneg %p274
        %p709 = pneg %p271
        %s710 = sand.u32 %s33, 1
        %s711 = scalar_lea.sflag [#allocation7], %s710
        %s712 = sand.u32 %s287, 1
        %s713 = scalar_lea.vmem [#allocation6], %s712
        %p714 = pneg %p300
        %p715 = pneg %p297
        %p716 = scmp.lt.s32.totalorder %s38, 1
        %s717 = scalar_select %p716, %s38, 1
        %s718 = smul.addr %s717, 4
        %s719 = smul.addr %s718, 4
        %s720 = scalar_lea.vmem %s10, %s719
        %p721 = pneg %p326
        %p722 = pneg %p323
        %s723 = sand.u32 %s33, 1
        %s724 = scalar_lea.sflag [#allocation7], %s723
        %s725 = sand.u32 %s339, 1
        %s726 = scalar_lea.vmem [#allocation8], %s725
        %p727 = pneg %p352
        %p728 = pneg %p349
        %p729 = scmp.lt.s32.totalorder %s38, 1
        %s730 = scalar_select %p729, %s38, 1
        %s731 = smul.addr %s730, 8
        %s732 = smul.addr %s731, 4
        %s733 = scalar_lea.vmem %s12, %s732
        %p734 = pneg %p378
        %p735 = pneg %p375
        %p736 = scmp.lt.s32.totalorder %s38, 1
        %s737 = scalar_select %p736, %s38, 1
        %s738 = scalar_lea.vmem %s13, %s737
        %p739 = pneg %p404
        %p740 = pneg %p401
        %p741 = pneg %p425
        %p742 = pneg %p422
        %p743 = pneg %p446
        %p744 = pneg %p443
        %p745 = pneg %p472
        %p746 = pneg %p469
        %s747 = smul.u32 2, %s37
        %p748 = scmp.lt.s32.totalorder %s37, 0
        %s749 = scalar_select %p748, %s37, 0
        %s750 = smul.addr %s749, 2
        %s751 = scalar_lea.vmem %s1, %s750
        %p752 = scmp.lt.s32.totalorder %s38, 1
        %s753 = scalar_select %p752, %s38, 1
        %s754 = scalar_lea.vmem %s2, %s753
        %p755 = scmp.lt.s32.totalorder %s38, 1
        %s756 = scalar_select %p755, %s38, 1
        %s757 = scalar_lea.vmem %s3, %s756
        %p758 = scmp.lt.s32.totalorder %s38, 1
        %s759 = scalar_select %p758, %s38, 1
        %s760 = smul.addr %s759, 4
        %s761 = smul.addr %s760, 4
        %s762 = scalar_lea.vmem %s4, %s761
        %p763 = scmp.lt.s32.totalorder %s38, 1
        %s764 = scalar_select %p763, %s38, 1
        %s765 = scalar_lea.vmem %s5, %s764
        %p766 = scmp.lt.s32.totalorder %s38, 1
        %s767 = scalar_select %p766, %s38, 1
        %s768 = smul.addr %s767, 4
        %s769 = smul.addr %s768, 4
        %s770 = scalar_lea.vmem %s6, %s769
        %p771 = scmp.lt.s32.totalorder %s38, 1
        %s772 = scalar_select %p771, %s38, 1
        %s773 = scalar_lea.vmem %s7, %s772
        %p774 = scmp.lt.s32.totalorder %s38, 1
        %s775 = scalar_select %p774, %s38, 1
        %s776 = scalar_lea.vmem %s8, %s775
        %p777 = scmp.lt.s32.totalorder %s38, 1
        %s778 = scalar_select %p777, %s38, 1
        %s779 = smul.addr %s778, 4
        %s780 = smul.addr %s779, 4
        %s781 = scalar_lea.vmem %s10, %s780
        %p782 = scmp.lt.s32.totalorder %s38, 1
        %s783 = scalar_select %p782, %s38, 1
        %s784 = smul.addr %s783, 8
        %s785 = smul.addr %s784, 4
        %s786 = scalar_lea.vmem %s12, %s785
        %p787 = scmp.lt.s32.totalorder %s38, 1
        %s788 = scalar_select %p787, %s38, 1
        %s789 = scalar_lea.vmem %s13, %s788
        %p791 = scmp.eq.s32.totalorder %s38, 0
        // Predicated region
        $region101: #{tpu_custom_call.1} parent=83 // pred_check
          %p792 = pneg %p791
        $region102: #{tpu_custom_call.1} parent=83 // pred_check_branch
          %794 = sbr.rel (%p792) target = $region104
        $region103: #{tpu_custom_call.1} parent=83 // pred_region
          %v795 = vld [vmem:[#allocation3] sm:$0xff]
          %v796 = vld [vmem:[#allocation3 + $0x8] sm:$0xff]
          %vm797 = vcmask 261120
          %798 = vst.msk [vmem:[#allocation2] sm:$0xff] %vm797, %v795
          %799 = vst.msk [vmem:[#allocation2 + $0x8] sm:$0xff] %vm797, %v796
        $region104: #{tpu_custom_call.1} parent=83 // pred_fallthru
          _
        %v800 = vld [vmem:[#allocation2] sm:$0xff]
        %v801 = vld [vmem:[#allocation2 + $0x8] sm:$0xff]
        %v802 = vld [vmem:[%s754] sm:$0x1]
        %v803 = vld [vmem:[%s757] sm:$0x1]
        %vm804 = vcmask 261120
        %v805 = vsel %vm804, %v800, 0.0
        %806 = vadd.xlane.f32.xlu0 %v805
        %v807 = vpop.xlane.xlu0 %806
        %v808 = vsel %vm804, %v801, 0.0
        %809 = vadd.xlane.f32.xlu0 %v808
        %v810 = vpop.xlane.xlu0 %809
        %v811 = vrcp.pop 32.0
        %v812 = vmul.f32 %v807, %v811
        %v813 = vmul.f32 %v810, %v811
        %v814 = vsub.f32 %v800, %v812
        %v815 = vsub.f32 %v801, %v813
        %v816 = vmul.f32 %v814, %v814
        %v817 = vmul.f32 %v815, %v815
        %v818 = vsel %vm804, %v816, 0.0
        %819 = vadd.xlane.f32.xlu0 %v818
        %v820 = vpop.xlane.xlu0 %819
        %v821 = vsel %vm804, %v817, 0.0
        %822 = vadd.xlane.f32.xlu0 %v821
        %v823 = vpop.xlane.xlu0 %822
        %v824 = vmul.f32 %v820, %v811
        %v825 = vmul.f32 %v823, %v811
        %v826 = vadd.f32 %v824, 1e-12
        %v827 = vadd.f32 %v825, 1e-12
        %v828 = vrsqrt.pop %v826
        %v829 = vrsqrt.pop %v827
        %v830 = vmul.f32 %v814, %v828
        %v831 = vmul.f32 %v815, %v829
        %v833 = vlaneseq
        %v834 = vshrl.u32 %v833, 7
        %v835 = vsub.s32 0, %v834
        %v836 = vrot.slane %v802, %v835
        %v838 = vmul.f32 %v830, %v836
        %v839 = vmul.f32 %v831, %v836
        %v841 = vlaneseq
        %v842 = vshrl.u32 %v841, 7
        %v843 = vsub.s32 0, %v842
        %v844 = vrot.slane %v803, %v843
        %v846 = vadd.f32 %v838, %v844
        %v847 = vadd.f32 %v839, %v844
        %v848 = vpack.c.bf16 %v847, %v846
        %v849 = vld [vmem:[%s762] sm:$0xf]
        %v850 = vld [vmem:[%s762 + $0x4] sm:$0xf]
        %v851 = vld [vmem:[%s762 + $0x8] sm:$0xf]
        %v852 = vld [vmem:[%s762 + $0xc] sm:$0xf]
        %v853 = vld [vmem:[%s765] sm:$0x1]
        %v855 = vlaneseq
        %v856 = vshrl.u32 %v855, 7
        %v857 = vsub.s32 0, %v856
        %v858 = vrot.slane %v853, %v857
        %v864 = vunpack.c.l.b16 %v849
        %v865 = vunpack.c.l.b16 %v850
        %v866 = vunpack.c.l.b16 %v851
        %v867 = vunpack.c.l.b16 %v852
        %v868 = vpack.c.b16 %v865, %v864
        %v869 = vpack.c.b16 %v867, %v866
        %v873 = vsel %vm804, %v848, 0
        %875 = vmatprep.subr.bf16.mxu0 0
        %876 = vmatpush1.bf16.msra.mxu0 %v868
        %877 = vmatprep.subr.bf16.mxu0 0
        %878 = vmatpush1.bf16.msra.mxu0 %v869
        %879 = vmatprep.subr.bf16.mxu0 0
        %880 = vmatpush1.bf16.msra.mxu0 0
        %881 = vmatprep.subr.bf16.mxu0 0
        %882 = vmatpush1.bf16.msra.mxu0 0
        %883 = vmatprep.subr.bf16.mxu0 0
        %884 = vmatpush1.bf16.msra.mxu0 0
        %885 = vmatprep.subr.bf16.mxu0 0
        %886 = vmatpush1.bf16.msra.mxu0 0
        %887 = vmatprep.subr.bf16.mxu0 0
        %888 = vmatpush1.bf16.msra.mxu0 0
        %889 = vmatprep.subr.bf16.mxu0 0
        %890 = vmatpush1.bf16.msra.mxu0 0
        %891 = vmatprep.subr.bf16.mxu0 0
        %892 = vmatpush1.bf16.msra.mxu0 0
        %893 = vmatprep.subr.bf16.mxu0 0
        %894 = vmatpush1.bf16.msra.mxu0 0
        %895 = vmatprep.subr.bf16.mxu0 0
        %896 = vmatpush1.bf16.msra.mxu0 0
        %897 = vmatprep.subr.bf16.mxu0 0
        %898 = vmatpush1.bf16.msra.mxu0 0
        %899 = vmatprep.subr.bf16.mxu0 0
        %900 = vmatpush1.bf16.msra.mxu0 0
        %901 = vmatprep.subr.bf16.mxu0 0
        %902 = vmatpush1.bf16.msra.mxu0 0
        %903 = vmatprep.subr.bf16.mxu0 0
        %904 = vmatpush1.bf16.msra.mxu0 0
        %905 = vmatprep.subr.bf16.mxu0 0
        %906 = vmatpush1.bf16.msra.mxu0 0
        %907 = vmatprep.mubr.bf16.mxu0 0
        %908 = vmatmul.mubr.bf16.gmra.mrb[0].mxu0 %v873
        %v909 = vpop.f32.mrb[0].mxu0
        %v910 = vadd.f32 %v858, %v909
        %v911 = vpop.f32.mrb[0].mxu0
        %v912 = vpop.f32.mrb[0].mxu0
        %v913 = vadd.f32 %v858, %v912
        %v914 = vpop.f32.mrb[0].mxu0
        %915 = vdwg.mxu0
        %917 = vrot.lane.b32.xlu0 %v910, 120
        %v918 = vpop.permute.xlu0 %917
        %920 = vrot.lane.b32.xlu0 %v910, 112
        %v921 = vpop.permute.xlu0 %920
        %923 = vrot.lane.b32.xlu0 %v910, 104
        %v924 = vpop.permute.xlu0 %923
        %927 = vrot.lane.b32.xlu0 %v913, 120
        %v928 = vpop.permute.xlu0 %927
        %930 = vrot.lane.b32.xlu0 %v913, 112
        %v931 = vpop.permute.xlu0 %930
        %933 = vrot.lane.b32.xlu0 %v913, 104
        %v934 = vpop.permute.xlu0 %933
        %v936 = vpack.c.bf16 %v910, %v910
        %v937 = vpack.c.bf16 %v918, %v918
        %v938 = vpack.c.bf16 %v921, %v921
        %v939 = vpack.c.bf16 %v924, %v924
        %v940 = vpack.c.bf16 %v913, %v913
        %v941 = vpack.c.bf16 %v928, %v928
        %v942 = vpack.c.bf16 %v931, %v931
        %v943 = vpack.c.bf16 %v934, %v934
        %945 = vrot.lane.b32.xlu0 %v936, 96
        %v946 = vpop.permute.xlu0 %945
        %vm947 = vcmask 64512
        %v949 = vsel %vm947, %v936, 0
        %v952 = vsel %vm947, %v946, 0
        %954 = vmatprep.subr.bf16.mxu0 0
        %955 = vmatpush1.bf16.xpose.msra.mxu0 %v952
        %956 = vmatprep.subr.bf16.mxu0 0
        %957 = vmatpush1.bf16.xpose.msra.mxu0 0
        %958 = vmatprep.subr.bf16.mxu0 0
        %959 = vmatpush1.bf16.xpose.msra.mxu0 0
        %960 = vmatprep.subr.bf16.mxu0 0
        %961 = vmatpush1.bf16.xpose.msra.mxu0 0
        %962 = vmatprep.subr.bf16.mxu0 0
        %963 = vmatpush1.bf16.xpose.msra.mxu0 0
        %964 = vmatprep.subr.bf16.mxu0 0
        %965 = vmatpush1.bf16.xpose.msra.mxu0 0
        %966 = vmatprep.subr.bf16.mxu0 0
        %967 = vmatpush1.bf16.xpose.msra.mxu0 0
        %968 = vmatprep.subr.bf16.mxu0 0
        %969 = vmatpush1.bf16.xpose.msra.mxu0 0
        %970 = vmatprep.subr.bf16.mxu0 0
        %971 = vmatpush1.bf16.xpose.msra.mxu0 0
        %972 = vmatprep.subr.bf16.mxu0 0
        %973 = vmatpush1.bf16.xpose.msra.mxu0 0
        %974 = vmatprep.subr.bf16.mxu0 0
        %975 = vmatpush1.bf16.xpose.msra.mxu0 0
        %976 = vmatprep.subr.bf16.mxu0 0
        %977 = vmatpush1.bf16.xpose.msra.mxu0 0
        %978 = vmatprep.subr.bf16.mxu0 0
        %979 = vmatpush1.bf16.xpose.msra.mxu0 0
        %980 = vmatprep.subr.bf16.mxu0 0
        %981 = vmatpush1.bf16.xpose.msra.mxu0 0
        %982 = vmatprep.subr.bf16.mxu0 0
        %983 = vmatpush1.bf16.xpose.msra.mxu0 0
        %984 = vmatprep.subr.bf16.mxu0 0
        %985 = vmatpush1.bf16.xpose.msra.mxu0 0
        %986 = vmatprep.mubr.bf16.mxu0 0
        %987 = vmatmul.mubr.bf16.gmra.mrb[0].mxu0 %v949
        %v988 = vpop.f32.mrb[0].mxu0
        %v989 = vadd.f32 0.0, %v988
        %v990 = vpop.f32.mrb[0].mxu0
        %v991 = vpop.f32.mrb[0].mxu0
        %v992 = vpop.f32.mrb[0].mxu0
        %993 = vdwg.mxu0
        %995 = vrot.lane.b32.xlu0 %v937, 96
        %v996 = vpop.permute.xlu0 %995
        %v998 = vsel %vm947, %v937, 0
        %v1001 = vsel %vm947, %v996, 0
        %1003 = vmatprep.subr.bf16.mxu0 0
        %1004 = vmatpush1.bf16.xpose.msra.mxu0 %v1001
        %1005 = vmatprep.subr.bf16.mxu0 0
        %1006 = vmatpush1.bf16.xpose.msra.mxu0 0
        %1007 = vmatprep.subr.bf16.mxu0 0
        %1008 = vmatpush1.bf16.xpose.msra.mxu0 0
        %1009 = vmatprep.subr.bf16.mxu0 0
        %1010 = vmatpush1.bf16.xpose.msra.mxu0 0
        %1011 = vmatprep.subr.bf16.mxu0 0
        %1012 = vmatpush1.bf16.xpose.msra.mxu0 0
        %1013 = vmatprep.subr.bf16.mxu0 0
        %1014 = vmatpush1.bf16.xpose.msra.mxu0 0
        %1015 = vmatprep.subr.bf16.mxu0 0
        %1016 = vmatpush1.bf16.xpose.msra.mxu0 0
        %1017 = vmatprep.subr.bf16.mxu0 0
        %1018 = vmatpush1.bf16.xpose.msra.mxu0 0
        %1019 = vmatprep.subr.bf16.mxu0 0
        %1020 = vmatpush1.bf16.xpose.msra.mxu0 0
        %1021 = vmatprep.subr.bf16.mxu0 0
        %1022 = vmatpush1.bf16.xpose.msra.mxu0 0
        %1023 = vmatprep.subr.bf16.mxu0 0
        %1024 = vmatpush1.bf16.xpose.msra.mxu0 0
        %1025 = vmatprep.subr.bf16.mxu0 0
        %1026 = vmatpush1.bf16.xpose.msra.mxu0 0
        %1027 = vmatprep.subr.bf16.mxu0 0
        %1028 = vmatpush1.bf16.xpose.msra.mxu0 0
        %1029 = vmatprep.subr.bf16.mxu0 0
        %1030 = vmatpush1.bf16.xpose.msra.mxu0 0
        %1031 = vmatprep.subr.bf16.mxu0 0
        %1032 = vmatpush1.bf16.xpose.msra.mxu0 0
        %1033 = vmatprep.subr.bf16.mxu0 0
        %1034 = vmatpush1.bf16.xpose.msra.mxu0 0
        %1035 = vmatprep.mubr.bf16.mxu0 0
        %1036 = vmatmul.mubr.bf16.gmra.mrb[0].mxu0 %v998
        %v1037 = vpop.f32.mrb[0].mxu0
        %v1038 = vadd.f32 0.0, %v1037
        %v1039 = vpop.f32.mrb[0].mxu0
        %v1040 = vpop.f32.mrb[0].mxu0
        %v1041 = vpop.f32.mrb[0].mxu0
        %1042 = vdwg.mxu0
        %1044 = vrot.lane.b32.xlu0 %v938, 96
        %v1045 = vpop.permute.xlu0 %1044
        %v1047 = vsel %vm947, %v938, 0
        %v1050 = vsel %vm947, %v1045, 0
        %1052 = vmatprep.subr.bf16.mxu0 0
        %1053 = vmatpush1.bf16.xpose.msra.mxu0 %v1050
        %1054 = vmatprep.subr.bf16.mxu0 0
        %1055 = vmatpush1.bf16.xpose.msra.mxu0 0
        %1056 = vmatprep.subr.bf16.mxu0 0
        %1057 = vmatpush1.bf16.xpose.msra.mxu0 0
        %1058 = vmatprep.subr.bf16.mxu0 0
        %1059 = vmatpush1.bf16.xpose.msra.mxu0 0
        %1060 = vmatprep.subr.bf16.mxu0 0
        %1061 = vmatpush1.bf16.xpose.msra.mxu0 0
        %1062 = vmatprep.subr.bf16.mxu0 0
        %1063 = vmatpush1.bf16.xpose.msra.mxu0 0
        %1064 = vmatprep.subr.bf16.mxu0 0
        %1065 = vmatpush1.bf16.xpose.msra.mxu0 0
        %1066 = vmatprep.subr.bf16.mxu0 0
        %1067 = vmatpush1.bf16.xpose.msra.mxu0 0
        %1068 = vmatprep.subr.bf16.mxu0 0
        %1069 = vmatpush1.bf16.xpose.msra.mxu0 0
        %1070 = vmatprep.subr.bf16.mxu0 0
        %1071 = vmatpush1.bf16.xpose.msra.mxu0 0
        %1072 = vmatprep.subr.bf16.mxu0 0
        %1073 = vmatpush1.bf16.xpose.msra.mxu0 0
        %1074 = vmatprep.subr.bf16.mxu0 0
        %1075 = vmatpush1.bf16.xpose.msra.mxu0 0
        %1076 = vmatprep.subr.bf16.mxu0 0
        %1077 = vmatpush1.bf16.xpose.msra.mxu0 0
        %1078 = vmatprep.subr.bf16.mxu0 0
        %1079 = vmatpush1.bf16.xpose.msra.mxu0 0
        %1080 = vmatprep.subr.bf16.mxu0 0
        %1081 = vmatpush1.bf16.xpose.msra.mxu0 0
        %1082 = vmatprep.subr.bf16.mxu0 0
        %1083 = vmatpush1.bf16.xpose.msra.mxu0 0
        %1084 = vmatprep.mubr.bf16.mxu0 0
        %1085 = vmatmul.mubr.bf16.gmra.mrb[0].mxu0 %v1047
        %v1086 = vpop.f32.mrb[0].mxu0
        %v1087 = vadd.f32 0.0, %v1086
        %v1088 = vpop.f32.mrb[0].mxu0
        %v1089 = vpop.f32.mrb[0].mxu0
        %v1090 = vpop.f32.mrb[0].mxu0
        %1091 = vdwg.mxu0
        %1093 = vrot.lane.b32.xlu0 %v939, 96
        %v1094 = vpop.permute.xlu0 %1093
        %v1096 = vsel %vm947, %v939, 0
        %v1099 = vsel %vm947, %v1094, 0
        %1101 = vmatprep.subr.bf16.mxu0 0
        %1102 = vmatpush1.bf16.xpose.msra.mxu0 %v1099
        %1103 = vmatprep.subr.bf16.mxu0 0
        %1104 = vmatpush1.bf16.xpose.msra.mxu0 0
        %1105 = vmatprep.subr.bf16.mxu0 0
        %1106 = vmatpush1.bf16.xpose.msra.mxu0 0
        %1107 = vmatprep.subr.bf16.mxu0 0
        %1108 = vmatpush1.bf16.xpose.msra.mxu0 0
        %1109 = vmatprep.subr.bf16.mxu0 0
        %1110 = vmatpush1.bf16.xpose.msra.mxu0 0
        %1111 = vmatprep.subr.bf16.mxu0 0
        %1112 = vmatpush1.bf16.xpose.msra.mxu0 0
        %1113 = vmatprep.subr.bf16.mxu0 0
        %1114 = vmatpush1.bf16.xpose.msra.mxu0 0
        %1115 = vmatprep.subr.bf16.mxu0 0
        %1116 = vmatpush1.bf16.xpose.msra.mxu0 0
        %1117 = vmatprep.subr.bf16.mxu0 0
        %1118 = vmatpush1.bf16.xpose.msra.mxu0 0
        %1119 = vmatprep.subr.bf16.mxu0 0
        %1120 = vmatpush1.bf16.xpose.msra.mxu0 0
        %1121 = vmatprep.subr.bf16.mxu0 0
        %1122 = vmatpush1.bf16.xpose.msra.mxu0 0
        %1123 = vmatprep.subr.bf16.mxu0 0
        %1124 = vmatpush1.bf16.xpose.msra.mxu0 0
        %1125 = vmatprep.subr.bf16.mxu0 0
        %1126 = vmatpush1.bf16.xpose.msra.mxu0 0
        %1127 = vmatprep.subr.bf16.mxu0 0
        %1128 = vmatpush1.bf16.xpose.msra.mxu0 0
        %1129 = vmatprep.subr.bf16.mxu0 0
        %1130 = vmatpush1.bf16.xpose.msra.mxu0 0
        %1131 = vmatprep.subr.bf16.mxu0 0
        %1132 = vmatpush1.bf16.xpose.msra.mxu0 0
        %1133 = vmatprep.mubr.bf16.mxu0 0
        %1134 = vmatmul.mubr.bf16.gmra.mrb[0].mxu0 %v1096
        %v1135 = vpop.f32.mrb[0].mxu0
        %v1136 = vadd.f32 0.0, %v1135
        %v1137 = vpop.f32.mrb[0].mxu0
        %v1138 = vpop.f32.mrb[0].mxu0
        %v1139 = vpop.f32.mrb[0].mxu0
        %1140 = vdwg.mxu0
        %1142 = vrot.lane.b32.xlu0 %v940, 96
        %v1143 = vpop.permute.xlu0 %1142
        %v1145 = vsel %vm947, %v940, 0
        %v1148 = vsel %vm947, %v1143, 0
        %1150 = vmatprep.subr.bf16.mxu0 0
        %1151 = vmatpush1.bf16.xpose.msra.mxu0 %v1148
        %1152 = vmatprep.subr.bf16.mxu0 0
        %1153 = vmatpush1.bf16.xpose.msra.mxu0 0
        %1154 = vmatprep.subr.bf16.mxu0 0
        %1155 = vmatpush1.bf16.xpose.msra.mxu0 0
        %1156 = vmatprep.subr.bf16.mxu0 0
        %1157 = vmatpush1.bf16.xpose.msra.mxu0 0
        %1158 = vmatprep.subr.bf16.mxu0 0
        %1159 = vmatpush1.bf16.xpose.msra.mxu0 0
        %1160 = vmatprep.subr.bf16.mxu0 0
        %1161 = vmatpush1.bf16.xpose.msra.mxu0 0
        %1162 = vmatprep.subr.bf16.mxu0 0
        %1163 = vmatpush1.bf16.xpose.msra.mxu0 0
        %1164 = vmatprep.subr.bf16.mxu0 0
        %1165 = vmatpush1.bf16.xpose.msra.mxu0 0
        %1166 = vmatprep.subr.bf16.mxu0 0
        %1167 = vmatpush1.bf16.xpose.msra.mxu0 0
        %1168 = vmatprep.subr.bf16.mxu0 0
        %1169 = vmatpush1.bf16.xpose.msra.mxu0 0
        %1170 = vmatprep.subr.bf16.mxu0 0
        %1171 = vmatpush1.bf16.xpose.msra.mxu0 0
        %1172 = vmatprep.subr.bf16.mxu0 0
        %1173 = vmatpush1.bf16.xpose.msra.mxu0 0
        %1174 = vmatprep.subr.bf16.mxu0 0
        %1175 = vmatpush1.bf16.xpose.msra.mxu0 0
        %1176 = vmatprep.subr.bf16.mxu0 0
        %1177 = vmatpush1.bf16.xpose.msra.mxu0 0
        %1178 = vmatprep.subr.bf16.mxu0 0
        %1179 = vmatpush1.bf16.xpose.msra.mxu0 0
        %1180 = vmatprep.subr.bf16.mxu0 0
        %1181 = vmatpush1.bf16.xpose.msra.mxu0 0
        %1182 = vmatprep.mubr.bf16.mxu0 0
        %1183 = vmatmul.mubr.bf16.gmra.mrb[0].mxu0 %v1145
        %v1184 = vpop.f32.mrb[0].mxu0
        %v1185 = vadd.f32 0.0, %v1184
        %v1186 = vpop.f32.mrb[0].mxu0
        %v1187 = vpop.f32.mrb[0].mxu0
        %v1188 = vpop.f32.mrb[0].mxu0
        %1189 = vdwg.mxu0
        %1191 = vrot.lane.b32.xlu0 %v941, 96
        %v1192 = vpop.permute.xlu0 %1191
        %v1194 = vsel %vm947, %v941, 0
        %v1197 = vsel %vm947, %v1192, 0
        %1199 = vmatprep.subr.bf16.mxu0 0
        %1200 = vmatpush1.bf16.xpose.msra.mxu0 %v1197
        %1201 = vmatprep.subr.bf16.mxu0 0
        %1202 = vmatpush1.bf16.xpose.msra.mxu0 0
        %1203 = vmatprep.subr.bf16.mxu0 0
        %1204 = vmatpush1.bf16.xpose.msra.mxu0 0
        %1205 = vmatprep.subr.bf16.mxu0 0
        %1206 = vmatpush1.bf16.xpose.msra.mxu0 0
        %1207 = vmatprep.subr.bf16.mxu0 0
        %1208 = vmatpush1.bf16.xpose.msra.mxu0 0
        %1209 = vmatprep.subr.bf16.mxu0 0
        %1210 = vmatpush1.bf16.xpose.msra.mxu0 0
        %1211 = vmatprep.subr.bf16.mxu0 0
        %1212 = vmatpush1.bf16.xpose.msra.mxu0 0
        %1213 = vmatprep.subr.bf16.mxu0 0
        %1214 = vmatpush1.bf16.xpose.msra.mxu0 0
        %1215 = vmatprep.subr.bf16.mxu0 0
        %1216 = vmatpush1.bf16.xpose.msra.mxu0 0
        %1217 = vmatprep.subr.bf16.mxu0 0
        %1218 = vmatpush1.bf16.xpose.msra.mxu0 0
        %1219 = vmatprep.subr.bf16.mxu0 0
        %1220 = vmatpush1.bf16.xpose.msra.mxu0 0
        %1221 = vmatprep.subr.bf16.mxu0 0
        %1222 = vmatpush1.bf16.xpose.msra.mxu0 0
        %1223 = vmatprep.subr.bf16.mxu0 0
        %1224 = vmatpush1.bf16.xpose.msra.mxu0 0
        %1225 = vmatprep.subr.bf16.mxu0 0
        %1226 = vmatpush1.bf16.xpose.msra.mxu0 0
        %1227 = vmatprep.subr.bf16.mxu0 0
        %1228 = vmatpush1.bf16.xpose.msra.mxu0 0
        %1229 = vmatprep.subr.bf16.mxu0 0
        %1230 = vmatpush1.bf16.xpose.msra.mxu0 0
        %1231 = vmatprep.mubr.bf16.mxu0 0
        %1232 = vmatmul.mubr.bf16.gmra.mrb[0].mxu0 %v1194
        %v1233 = vpop.f32.mrb[0].mxu0
        %v1234 = vadd.f32 0.0, %v1233
        %v1235 = vpop.f32.mrb[0].mxu0
        %v1236 = vpop.f32.mrb[0].mxu0
        %v1237 = vpop.f32.mrb[0].mxu0
        %1238 = vdwg.mxu0
        %1240 = vrot.lane.b32.xlu0 %v942, 96
        %v1241 = vpop.permute.xlu0 %1240
        %v1243 = vsel %vm947, %v942, 0
        %v1246 = vsel %vm947, %v1241, 0
        %1248 = vmatprep.subr.bf16.mxu0 0
        %1249 = vmatpush1.bf16.xpose.msra.mxu0 %v1246
        %1250 = vmatprep.subr.bf16.mxu0 0
        %1251 = vmatpush1.bf16.xpose.msra.mxu0 0
        %1252 = vmatprep.subr.bf16.mxu0 0
        %1253 = vmatpush1.bf16.xpose.msra.mxu0 0
        %1254 = vmatprep.subr.bf16.mxu0 0
        %1255 = vmatpush1.bf16.xpose.msra.mxu0 0
        %1256 = vmatprep.subr.bf16.mxu0 0
        %1257 = vmatpush1.bf16.xpose.msra.mxu0 0
        %1258 = vmatprep.subr.bf16.mxu0 0
        %1259 = vmatpush1.bf16.xpose.msra.mxu0 0
        %1260 = vmatprep.subr.bf16.mxu0 0
        %1261 = vmatpush1.bf16.xpose.msra.mxu0 0
        %1262 = vmatprep.subr.bf16.mxu0 0
        %1263 = vmatpush1.bf16.xpose.msra.mxu0 0
        %1264 = vmatprep.subr.bf16.mxu0 0
        %1265 = vmatpush1.bf16.xpose.msra.mxu0 0
        %1266 = vmatprep.subr.bf16.mxu0 0
        %1267 = vmatpush1.bf16.xpose.msra.mxu0 0
        %1268 = vmatprep.subr.bf16.mxu0 0
        %1269 = vmatpush1.bf16.xpose.msra.mxu0 0
        %1270 = vmatprep.subr.bf16.mxu0 0
        %1271 = vmatpush1.bf16.xpose.msra.mxu0 0
        %1272 = vmatprep.subr.bf16.mxu0 0
        %1273 = vmatpush1.bf16.xpose.msra.mxu0 0
        %1274 = vmatprep.subr.bf16.mxu0 0
        %1275 = vmatpush1.bf16.xpose.msra.mxu0 0
        %1276 = vmatprep.subr.bf16.mxu0 0
        %1277 = vmatpush1.bf16.xpose.msra.mxu0 0
        %1278 = vmatprep.subr.bf16.mxu0 0
        %1279 = vmatpush1.bf16.xpose.msra.mxu0 0
        %1280 = vmatprep.mubr.bf16.mxu0 0
        %1281 = vmatmul.mubr.bf16.gmra.mrb[0].mxu0 %v1243
        %v1282 = vpop.f32.mrb[0].mxu0
        %v1283 = vadd.f32 0.0, %v1282
        %v1284 = vpop.f32.mrb[0].mxu0
        %v1285 = vpop.f32.mrb[0].mxu0
        %v1286 = vpop.f32.mrb[0].mxu0
        %1287 = vdwg.mxu0
        %1289 = vrot.lane.b32.xlu0 %v943, 96
        %v1290 = vpop.permute.xlu0 %1289
        %v1292 = vsel %vm947, %v943, 0
        %v1295 = vsel %vm947, %v1290, 0
        %1297 = vmatprep.subr.bf16.mxu0 0
        %1298 = vmatpush1.bf16.xpose.msra.mxu0 %v1295
        %1299 = vmatprep.subr.bf16.mxu0 0
        %1300 = vmatpush1.bf16.xpose.msra.mxu0 0
        %1301 = vmatprep.subr.bf16.mxu0 0
        %1302 = vmatpush1.bf16.xpose.msra.mxu0 0
        %1303 = vmatprep.subr.bf16.mxu0 0
        %1304 = vmatpush1.bf16.xpose.msra.mxu0 0
        %1305 = vmatprep.subr.bf16.mxu0 0
        %1306 = vmatpush1.bf16.xpose.msra.mxu0 0
        %1307 = vmatprep.subr.bf16.mxu0 0
        %1308 = vmatpush1.bf16.xpose.msra.mxu0 0
        %1309 = vmatprep.subr.bf16.mxu0 0
        %1310 = vmatpush1.bf16.xpose.msra.mxu0 0
        %1311 = vmatprep.subr.bf16.mxu0 0
        %1312 = vmatpush1.bf16.xpose.msra.mxu0 0
        %1313 = vmatprep.subr.bf16.mxu0 0
        %1314 = vmatpush1.bf16.xpose.msra.mxu0 0
        %1315 = vmatprep.subr.bf16.mxu0 0
        %1316 = vmatpush1.bf16.xpose.msra.mxu0 0
        %1317 = vmatprep.subr.bf16.mxu0 0
        %1318 = vmatpush1.bf16.xpose.msra.mxu0 0
        %1319 = vmatprep.subr.bf16.mxu0 0
        %1320 = vmatpush1.bf16.xpose.msra.mxu0 0
        %1321 = vmatprep.subr.bf16.mxu0 0
        %1322 = vmatpush1.bf16.xpose.msra.mxu0 0
        %1323 = vmatprep.subr.bf16.mxu0 0
        %1324 = vmatpush1.bf16.xpose.msra.mxu0 0
        %1325 = vmatprep.subr.bf16.mxu0 0
        %1326 = vmatpush1.bf16.xpose.msra.mxu0 0
        %1327 = vmatprep.subr.bf16.mxu0 0
        %1328 = vmatpush1.bf16.xpose.msra.mxu0 0
        %1329 = vmatprep.mubr.bf16.mxu0 0
        %1330 = vmatmul.mubr.bf16.gmra.mrb[0].mxu0 %v1292
        %v1331 = vpop.f32.mrb[0].mxu0
        %v1332 = vadd.f32 0.0, %v1331
        %v1333 = vpop.f32.mrb[0].mxu0
        %v1334 = vpop.f32.mrb[0].mxu0
        %v1335 = vpop.f32.mrb[0].mxu0
        %1336 = vdwg.mxu0
        %v1337 = vlaneseq
        %v1338 = vshrl.u32 %v1337, 7
        %v1339 = vlaneseq
        %v1340 = vand.u32 %v1339, 127
        %vm1341 = vcmp.le.s32.totalorder %v1340, %v1338
        %v1342 = vsel %vm1341, 1, 0
        %vm1343 = vcmp.eq.s32.totalorder %v1342, 1
        %v1344 = vsel %vm1343, %v989, -1e+30
        %v1345 = vsel %vm1343, %v1038, -1e+30
        %v1346 = vsel %vm1343, %v1087, -1e+30
        %v1347 = vsel %vm1343, %v1136, -1e+30
        %v1348 = vsel %vm1343, %v1185, -1e+30
        %v1349 = vsel %vm1343, %v1234, -1e+30
        %v1350 = vsel %vm1343, %v1283, -1e+30
        %v1351 = vsel %vm1343, %v1332, -1e+30
        %v1352 = vsel %vm947, %v1344, -inf
        %1353 = vmax.xlane.f32.xlu0 %v1352
        %v1354 = vpop.xlane.xlu0 %1353
        %v1355 = vsel %vm947, %v1345, -inf
        %1356 = vmax.xlane.f32.xlu0 %v1355
        %v1357 = vpop.xlane.xlu0 %1356
        %v1358 = vsel %vm947, %v1346, -inf
        %1359 = vmax.xlane.f32.xlu0 %v1358
        %v1360 = vpop.xlane.xlu0 %1359
        %v1361 = vsel %vm947, %v1347, -inf
        %1362 = vmax.xlane.f32.xlu0 %v1361
        %v1363 = vpop.xlane.xlu0 %1362
        %v1364 = vsel %vm947, %v1348, -inf
        %1365 = vmax.xlane.f32.xlu0 %v1364
        %v1366 = vpop.xlane.xlu0 %1365
        %v1367 = vsel %vm947, %v1349, -inf
        %1368 = vmax.xlane.f32.xlu0 %v1367
        %v1369 = vpop.xlane.xlu0 %1368
        %v1370 = vsel %vm947, %v1350, -inf
        %1371 = vmax.xlane.f32.xlu0 %v1370
        %v1372 = vpop.xlane.xlu0 %1371
        %v1373 = vsel %vm947, %v1351, -inf
        %1374 = vmax.xlane.f32.xlu0 %v1373
        %v1375 = vpop.xlane.xlu0 %1374
        %v1376 = vsub.f32 %v1344, %v1354
        %v1377 = vsub.f32 %v1345, %v1357
        %v1378 = vsub.f32 %v1346, %v1360
        %v1379 = vsub.f32 %v1347, %v1363
        %v1380 = vsub.f32 %v1348, %v1366
        %v1381 = vsub.f32 %v1349, %v1369
        %v1382 = vsub.f32 %v1350, %v1372
        %v1383 = vsub.f32 %v1351, %v1375
        %v1384 = vmul.f32 %v1376, 1.442695
        %v1385 = vpow.pop %v1384
        %v1386 = vmul.f32 %v1377, 1.442695
        %v1387 = vpow.pop %v1386
        %v1388 = vmul.f32 %v1378, 1.442695
        %v1389 = vpow.pop %v1388
        %v1390 = vmul.f32 %v1379, 1.442695
        %v1391 = vpow.pop %v1390
        %v1392 = vmul.f32 %v1380, 1.442695
        %v1393 = vpow.pop %v1392
        %v1394 = vmul.f32 %v1381, 1.442695
        %v1395 = vpow.pop %v1394
        %v1396 = vmul.f32 %v1382, 1.442695
        %v1397 = vpow.pop %v1396
        %v1398 = vmul.f32 %v1383, 1.442695
        %v1399 = vpow.pop %v1398
        %v1400 = vsel %vm947, %v1385, 0.0
        %1401 = vadd.xlane.f32.xlu0 %v1400
        %v1402 = vpop.xlane.xlu0 %1401
        %v1403 = vsel %vm947, %v1387, 0.0
        %1404 = vadd.xlane.f32.xlu0 %v1403
        %v1405 = vpop.xlane.xlu0 %1404
        %v1406 = vsel %vm947, %v1389, 0.0
        %1407 = vadd.xlane.f32.xlu0 %v1406
        %v1408 = vpop.xlane.xlu0 %1407
        %v1409 = vsel %vm947, %v1391, 0.0
        %1410 = vadd.xlane.f32.xlu0 %v1409
        %v1411 = vpop.xlane.xlu0 %1410
        %v1412 = vsel %vm947, %v1393, 0.0
        %1413 = vadd.xlane.f32.xlu0 %v1412
        %v1414 = vpop.xlane.xlu0 %1413
        %v1415 = vsel %vm947, %v1395, 0.0
        %1416 = vadd.xlane.f32.xlu0 %v1415
        %v1417 = vpop.xlane.xlu0 %1416
        %v1418 = vsel %vm947, %v1397, 0.0
        %1419 = vadd.xlane.f32.xlu0 %v1418
        %v1420 = vpop.xlane.xlu0 %1419
        %v1421 = vsel %vm947, %v1399, 0.0
        %1422 = vadd.xlane.f32.xlu0 %v1421
        %v1423 = vpop.xlane.xlu0 %1422
        %v1424 = vrcp.pop %v1402
        %v1425 = vrcp.pop %v1405
        %v1426 = vrcp.pop %v1408
        %v1427 = vrcp.pop %v1411
        %v1428 = vrcp.pop %v1414
        %v1429 = vrcp.pop %v1417
        %v1430 = vrcp.pop %v1420
        %v1431 = vrcp.pop %v1423
        %v1432 = vmul.f32 %v1385, %v1424
        %v1433 = vmul.f32 %v1387, %v1425
        %v1434 = vmul.f32 %v1389, %v1426
        %v1435 = vmul.f32 %v1391, %v1427
        %v1436 = vmul.f32 %v1393, %v1428
        %v1437 = vmul.f32 %v1395, %v1429
        %v1438 = vmul.f32 %v1397, %v1430
        %v1439 = vmul.f32 %v1399, %v1431
        %v1440 = vpack.c.bf16 %v1432, %v1432
        %v1441 = vpack.c.bf16 %v1433, %v1433
        %v1442 = vpack.c.bf16 %v1434, %v1434
        %v1443 = vpack.c.bf16 %v1435, %v1435
        %v1444 = vpack.c.bf16 %v1436, %v1436
        %v1445 = vpack.c.bf16 %v1437, %v1437
        %v1446 = vpack.c.bf16 %v1438, %v1438
        %v1447 = vpack.c.bf16 %v1439, %v1439
        %1448 = vrot.lane.b32.xlu0 %v936, 64
        %v1449 = vpop.permute.xlu0 %1448
        %v1451 = vsel %vm947, %v1440, 0
        %vm1453 = vcmask 1043456
        %v1455 = vsel %vm1453, %v1449, 0
        %1457 = vmatprep.subr.bf16.mxu0 0
        %1458 = vmatpush1.bf16.msra.mxu0 %v1455
        %1459 = vmatprep.subr.bf16.mxu0 0
        %1460 = vmatpush1.bf16.msra.mxu0 0
        %1461 = vmatprep.subr.bf16.mxu0 0
        %1462 = vmatpush1.bf16.msra.mxu0 0
        %1463 = vmatprep.subr.bf16.mxu0 0
        %1464 = vmatpush1.bf16.msra.mxu0 0
        %1465 = vmatprep.subr.bf16.mxu0 0
        %1466 = vmatpush1.bf16.msra.mxu0 0
        %1467 = vmatprep.subr.bf16.mxu0 0
        %1468 = vmatpush1.bf16.msra.mxu0 0
        %1469 = vmatprep.subr.bf16.mxu0 0
        %1470 = vmatpush1.bf16.msra.mxu0 0
        %1471 = vmatprep.subr.bf16.mxu0 0
        %1472 = vmatpush1.bf16.msra.mxu0 0
        %1473 = vmatprep.subr.bf16.mxu0 0
        %1474 = vmatpush1.bf16.msra.mxu0 0
        %1475 = vmatprep.subr.bf16.mxu0 0
        %1476 = vmatpush1.bf16.msra.mxu0 0
        %1477 = vmatprep.subr.bf16.mxu0 0
        %1478 = vmatpush1.bf16.msra.mxu0 0
        %1479 = vmatprep.subr.bf16.mxu0 0
        %1480 = vmatpush1.bf16.msra.mxu0 0
        %1481 = vmatprep.subr.bf16.mxu0 0
        %1482 = vmatpush1.bf16.msra.mxu0 0
        %1483 = vmatprep.subr.bf16.mxu0 0
        %1484 = vmatpush1.bf16.msra.mxu0 0
        %1485 = vmatprep.subr.bf16.mxu0 0
        %1486 = vmatpush1.bf16.msra.mxu0 0
        %1487 = vmatprep.subr.bf16.mxu0 0
        %1488 = vmatpush1.bf16.msra.mxu0 0
        %1489 = vmatprep.mubr.bf16.mxu0 0
        %1490 = vmatmul.mubr.bf16.gmra.mrb[0].mxu0 %v1451
        %v1491 = vpop.f32.mrb[0].mxu0
        %v1492 = vadd.f32 0.0, %v1491
        %v1493 = vpop.f32.mrb[0].mxu0
        %v1494 = vpop.f32.mrb[0].mxu0
        %v1495 = vpop.f32.mrb[0].mxu0
        %1496 = vdwg.mxu0
        %1497 = vrot.lane.b32.xlu0 %v937, 64
        %v1498 = vpop.permute.xlu0 %1497
        %v1500 = vsel %vm947, %v1441, 0
        %v1503 = vsel %vm1453, %v1498, 0
        %1505 = vmatprep.subr.bf16.mxu0 0
        %1506 = vmatpush1.bf16.msra.mxu0 %v1503
        %1507 = vmatprep.subr.bf16.mxu0 0
        %1508 = vmatpush1.bf16.msra.mxu0 0
        %1509 = vmatprep.subr.bf16.mxu0 0
        %1510 = vmatpush1.bf16.msra.mxu0 0
        %1511 = vmatprep.subr.bf16.mxu0 0
        %1512 = vmatpush1.bf16.msra.mxu0 0
        %1513 = vmatprep.subr.bf16.mxu0 0
        %1514 = vmatpush1.bf16.msra.mxu0 0
        %1515 = vmatprep.subr.bf16.mxu0 0
        %1516 = vmatpush1.bf16.msra.mxu0 0
        %1517 = vmatprep.subr.bf16.mxu0 0
        %1518 = vmatpush1.bf16.msra.mxu0 0
        %1519 = vmatprep.subr.bf16.mxu0 0
        %1520 = vmatpush1.bf16.msra.mxu0 0
        %1521 = vmatprep.subr.bf16.mxu0 0
        %1522 = vmatpush1.bf16.msra.mxu0 0
        %1523 = vmatprep.subr.bf16.mxu0 0
        %1524 = vmatpush1.bf16.msra.mxu0 0
        %1525 = vmatprep.subr.bf16.mxu0 0
        %1526 = vmatpush1.bf16.msra.mxu0 0
        %1527 = vmatprep.subr.bf16.mxu0 0
        %1528 = vmatpush1.bf16.msra.mxu0 0
        %1529 = vmatprep.subr.bf16.mxu0 0
        %1530 = vmatpush1.bf16.msra.mxu0 0
        %1531 = vmatprep.subr.bf16.mxu0 0
        %1532 = vmatpush1.bf16.msra.mxu0 0
        %1533 = vmatprep.subr.bf16.mxu0 0
        %1534 = vmatpush1.bf16.msra.mxu0 0
        %1535 = vmatprep.subr.bf16.mxu0 0
        %1536 = vmatpush1.bf16.msra.mxu0 0
        %1537 = vmatprep.mubr.bf16.mxu0 0
        %1538 = vmatmul.mubr.bf16.gmra.mrb[0].mxu0 %v1500
        %v1539 = vpop.f32.mrb[0].mxu0
        %v1540 = vadd.f32 0.0, %v1539
        %v1541 = vpop.f32.mrb[0].mxu0
        %v1542 = vpop.f32.mrb[0].mxu0
        %v1543 = vpop.f32.mrb[0].mxu0
        %1544 = vdwg.mxu0
        %1545 = vrot.lane.b32.xlu0 %v938, 64
        %v1546 = vpop.permute.xlu0 %1545
        %v1548 = vsel %vm947, %v1442, 0
        %v1551 = vsel %vm1453, %v1546, 0
        %1553 = vmatprep.subr.bf16.mxu0 0
        %1554 = vmatpush1.bf16.msra.mxu0 %v1551
        %1555 = vmatprep.subr.bf16.mxu0 0
        %1556 = vmatpush1.bf16.msra.mxu0 0
        %1557 = vmatprep.subr.bf16.mxu0 0
        %1558 = vmatpush1.bf16.msra.mxu0 0
        %1559 = vmatprep.subr.bf16.mxu0 0
        %1560 = vmatpush1.bf16.msra.mxu0 0
        %1561 = vmatprep.subr.bf16.mxu0 0
        %1562 = vmatpush1.bf16.msra.mxu0 0
        %1563 = vmatprep.subr.bf16.mxu0 0
        %1564 = vmatpush1.bf16.msra.mxu0 0
        %1565 = vmatprep.subr.bf16.mxu0 0
        %1566 = vmatpush1.bf16.msra.mxu0 0
        %1567 = vmatprep.subr.bf16.mxu0 0
        %1568 = vmatpush1.bf16.msra.mxu0 0
        %1569 = vmatprep.subr.bf16.mxu0 0
        %1570 = vmatpush1.bf16.msra.mxu0 0
        %1571 = vmatprep.subr.bf16.mxu0 0
        %1572 = vmatpush1.bf16.msra.mxu0 0
        %1573 = vmatprep.subr.bf16.mxu0 0
        %1574 = vmatpush1.bf16.msra.mxu0 0
        %1575 = vmatprep.subr.bf16.mxu0 0
        %1576 = vmatpush1.bf16.msra.mxu0 0
        %1577 = vmatprep.subr.bf16.mxu0 0
        %1578 = vmatpush1.bf16.msra.mxu0 0
        %1579 = vmatprep.subr.bf16.mxu0 0
        %1580 = vmatpush1.bf16.msra.mxu0 0
        %1581 = vmatprep.subr.bf16.mxu0 0
        %1582 = vmatpush1.bf16.msra.mxu0 0
        %1583 = vmatprep.subr.bf16.mxu0 0
        %1584 = vmatpush1.bf16.msra.mxu0 0
        %1585 = vmatprep.mubr.bf16.mxu0 0
        %1586 = vmatmul.mubr.bf16.gmra.mrb[0].mxu0 %v1548
        %v1587 = vpop.f32.mrb[0].mxu0
        %v1588 = vadd.f32 0.0, %v1587
        %v1589 = vpop.f32.mrb[0].mxu0
        %v1590 = vpop.f32.mrb[0].mxu0
        %v1591 = vpop.f32.mrb[0].mxu0
        %1592 = vdwg.mxu0
        %1593 = vrot.lane.b32.xlu0 %v939, 64
        %v1594 = vpop.permute.xlu0 %1593
        %v1596 = vsel %vm947, %v1443, 0
        %v1599 = vsel %vm1453, %v1594, 0
        %1601 = vmatprep.subr.bf16.mxu0 0
        %1602 = vmatpush1.bf16.msra.mxu0 %v1599
        %1603 = vmatprep.subr.bf16.mxu0 0
        %1604 = vmatpush1.bf16.msra.mxu0 0
        %1605 = vmatprep.subr.bf16.mxu0 0
        %1606 = vmatpush1.bf16.msra.mxu0 0
        %1607 = vmatprep.subr.bf16.mxu0 0
        %1608 = vmatpush1.bf16.msra.mxu0 0
        %1609 = vmatprep.subr.bf16.mxu0 0
        %1610 = vmatpush1.bf16.msra.mxu0 0
        %1611 = vmatprep.subr.bf16.mxu0 0
        %1612 = vmatpush1.bf16.msra.mxu0 0
        %1613 = vmatprep.subr.bf16.mxu0 0
        %1614 = vmatpush1.bf16.msra.mxu0 0
        %1615 = vmatprep.subr.bf16.mxu0 0
        %1616 = vmatpush1.bf16.msra.mxu0 0
        %1617 = vmatprep.subr.bf16.mxu0 0
        %1618 = vmatpush1.bf16.msra.mxu0 0
        %1619 = vmatprep.subr.bf16.mxu0 0
        %1620 = vmatpush1.bf16.msra.mxu0 0
        %1621 = vmatprep.subr.bf16.mxu0 0
        %1622 = vmatpush1.bf16.msra.mxu0 0
        %1623 = vmatprep.subr.bf16.mxu0 0
        %1624 = vmatpush1.bf16.msra.mxu0 0
        %1625 = vmatprep.subr.bf16.mxu0 0
        %1626 = vmatpush1.bf16.msra.mxu0 0
        %1627 = vmatprep.subr.bf16.mxu0 0
        %1628 = vmatpush1.bf16.msra.mxu0 0
        %1629 = vmatprep.subr.bf16.mxu0 0
        %1630 = vmatpush1.bf16.msra.mxu0 0
        %1631 = vmatprep.subr.bf16.mxu0 0
        %1632 = vmatpush1.bf16.msra.mxu0 0
        %1633 = vmatprep.mubr.bf16.mxu0 0
        %1634 = vmatmul.mubr.bf16.gmra.mrb[0].mxu0 %v1596
        %v1635 = vpop.f32.mrb[0].mxu0
        %v1636 = vadd.f32 0.0, %v1635
        %v1637 = vpop.f32.mrb[0].mxu0
        %v1638 = vpop.f32.mrb[0].mxu0
        %v1639 = vpop.f32.mrb[0].mxu0
        %1640 = vdwg.mxu0
        %1641 = vrot.lane.b32.xlu0 %v940, 64
        %v1642 = vpop.permute.xlu0 %1641
        %v1644 = vsel %vm947, %v1444, 0
        %v1647 = vsel %vm1453, %v1642, 0
        %1649 = vmatprep.subr.bf16.mxu0 0
        %1650 = vmatpush1.bf16.msra.mxu0 %v1647
        %1651 = vmatprep.subr.bf16.mxu0 0
        %1652 = vmatpush1.bf16.msra.mxu0 0
        %1653 = vmatprep.subr.bf16.mxu0 0
        %1654 = vmatpush1.bf16.msra.mxu0 0
        %1655 = vmatprep.subr.bf16.mxu0 0
        %1656 = vmatpush1.bf16.msra.mxu0 0
        %1657 = vmatprep.subr.bf16.mxu0 0
        %1658 = vmatpush1.bf16.msra.mxu0 0
        %1659 = vmatprep.subr.bf16.mxu0 0
        %1660 = vmatpush1.bf16.msra.mxu0 0
        %1661 = vmatprep.subr.bf16.mxu0 0
        %1662 = vmatpush1.bf16.msra.mxu0 0
        %1663 = vmatprep.subr.bf16.mxu0 0
        %1664 = vmatpush1.bf16.msra.mxu0 0
        %1665 = vmatprep.subr.bf16.mxu0 0
        %1666 = vmatpush1.bf16.msra.mxu0 0
        %1667 = vmatprep.subr.bf16.mxu0 0
        %1668 = vmatpush1.bf16.msra.mxu0 0
        %1669 = vmatprep.subr.bf16.mxu0 0
        %1670 = vmatpush1.bf16.msra.mxu0 0
        %1671 = vmatprep.subr.bf16.mxu0 0
        %1672 = vmatpush1.bf16.msra.mxu0 0
        %1673 = vmatprep.subr.bf16.mxu0 0
        %1674 = vmatpush1.bf16.msra.mxu0 0
        %1675 = vmatprep.subr.bf16.mxu0 0
        %1676 = vmatpush1.bf16.msra.mxu0 0
        %1677 = vmatprep.subr.bf16.mxu0 0
        %1678 = vmatpush1.bf16.msra.mxu0 0
        %1679 = vmatprep.subr.bf16.mxu0 0
        %1680 = vmatpush1.bf16.msra.mxu0 0
        %1681 = vmatprep.mubr.bf16.mxu0 0
        %1682 = vmatmul.mubr.bf16.gmra.mrb[0].mxu0 %v1644
        %v1683 = vpop.f32.mrb[0].mxu0
        %v1684 = vadd.f32 0.0, %v1683
        %v1685 = vpop.f32.mrb[0].mxu0
        %v1686 = vpop.f32.mrb[0].mxu0
        %v1687 = vpop.f32.mrb[0].mxu0
        %1688 = vdwg.mxu0
        %1689 = vrot.lane.b32.xlu0 %v941, 64
        %v1690 = vpop.permute.xlu0 %1689
        %v1692 = vsel %vm947, %v1445, 0
        %v1695 = vsel %vm1453, %v1690, 0
        %1697 = vmatprep.subr.bf16.mxu0 0
        %1698 = vmatpush1.bf16.msra.mxu0 %v1695
        %1699 = vmatprep.subr.bf16.mxu0 0
        %1700 = vmatpush1.bf16.msra.mxu0 0
        %1701 = vmatprep.subr.bf16.mxu0 0
        %1702 = vmatpush1.bf16.msra.mxu0 0
        %1703 = vmatprep.subr.bf16.mxu0 0
        %1704 = vmatpush1.bf16.msra.mxu0 0
        %1705 = vmatprep.subr.bf16.mxu0 0
        %1706 = vmatpush1.bf16.msra.mxu0 0
        %1707 = vmatprep.subr.bf16.mxu0 0
        %1708 = vmatpush1.bf16.msra.mxu0 0
        %1709 = vmatprep.subr.bf16.mxu0 0
        %1710 = vmatpush1.bf16.msra.mxu0 0
        %1711 = vmatprep.subr.bf16.mxu0 0
        %1712 = vmatpush1.bf16.msra.mxu0 0
        %1713 = vmatprep.subr.bf16.mxu0 0
        %1714 = vmatpush1.bf16.msra.mxu0 0
        %1715 = vmatprep.subr.bf16.mxu0 0
        %1716 = vmatpush1.bf16.msra.mxu0 0
        %1717 = vmatprep.subr.bf16.mxu0 0
        %1718 = vmatpush1.bf16.msra.mxu0 0
        %1719 = vmatprep.subr.bf16.mxu0 0
        %1720 = vmatpush1.bf16.msra.mxu0 0
        %1721 = vmatprep.subr.bf16.mxu0 0
        %1722 = vmatpush1.bf16.msra.mxu0 0
        %1723 = vmatprep.subr.bf16.mxu0 0
        %1724 = vmatpush1.bf16.msra.mxu0 0
        %1725 = vmatprep.subr.bf16.mxu0 0
        %1726 = vmatpush1.bf16.msra.mxu0 0
        %1727 = vmatprep.subr.bf16.mxu0 0
        %1728 = vmatpush1.bf16.msra.mxu0 0
        %1729 = vmatprep.mubr.bf16.mxu0 0
        %1730 = vmatmul.mubr.bf16.gmra.mrb[0].mxu0 %v1692
        %v1731 = vpop.f32.mrb[0].mxu0
        %v1732 = vadd.f32 0.0, %v1731
        %v1733 = vpop.f32.mrb[0].mxu0
        %v1734 = vpop.f32.mrb[0].mxu0
        %v1735 = vpop.f32.mrb[0].mxu0
        %1736 = vdwg.mxu0
        %1737 = vrot.lane.b32.xlu0 %v942, 64
        %v1738 = vpop.permute.xlu0 %1737
        %v1740 = vsel %vm947, %v1446, 0
        %v1743 = vsel %vm1453, %v1738, 0
        %1745 = vmatprep.subr.bf16.mxu0 0
        %1746 = vmatpush1.bf16.msra.mxu0 %v1743
        %1747 = vmatprep.subr.bf16.mxu0 0
        %1748 = vmatpush1.bf16.msra.mxu0 0
        %1749 = vmatprep.subr.bf16.mxu0 0
        %1750 = vmatpush1.bf16.msra.mxu0 0
        %1751 = vmatprep.subr.bf16.mxu0 0
        %1752 = vmatpush1.bf16.msra.mxu0 0
        %1753 = vmatprep.subr.bf16.mxu0 0
        %1754 = vmatpush1.bf16.msra.mxu0 0
        %1755 = vmatprep.subr.bf16.mxu0 0
        %1756 = vmatpush1.bf16.msra.mxu0 0
        %1757 = vmatprep.subr.bf16.mxu0 0
        %1758 = vmatpush1.bf16.msra.mxu0 0
        %1759 = vmatprep.subr.bf16.mxu0 0
        %1760 = vmatpush1.bf16.msra.mxu0 0
        %1761 = vmatprep.subr.bf16.mxu0 0
        %1762 = vmatpush1.bf16.msra.mxu0 0
        %1763 = vmatprep.subr.bf16.mxu0 0
        %1764 = vmatpush1.bf16.msra.mxu0 0
        %1765 = vmatprep.subr.bf16.mxu0 0
        %1766 = vmatpush1.bf16.msra.mxu0 0
        %1767 = vmatprep.subr.bf16.mxu0 0
        %1768 = vmatpush1.bf16.msra.mxu0 0
        %1769 = vmatprep.subr.bf16.mxu0 0
        %1770 = vmatpush1.bf16.msra.mxu0 0
        %1771 = vmatprep.subr.bf16.mxu0 0
        %1772 = vmatpush1.bf16.msra.mxu0 0
        %1773 = vmatprep.subr.bf16.mxu0 0
        %1774 = vmatpush1.bf16.msra.mxu0 0
        %1775 = vmatprep.subr.bf16.mxu0 0
        %1776 = vmatpush1.bf16.msra.mxu0 0
        %1777 = vmatprep.mubr.bf16.mxu0 0
        %1778 = vmatmul.mubr.bf16.gmra.mrb[0].mxu0 %v1740
        %v1779 = vpop.f32.mrb[0].mxu0
        %v1780 = vadd.f32 0.0, %v1779
        %v1781 = vpop.f32.mrb[0].mxu0
        %v1782 = vpop.f32.mrb[0].mxu0
        %v1783 = vpop.f32.mrb[0].mxu0
        %1784 = vdwg.mxu0
        %1785 = vrot.lane.b32.xlu0 %v943, 64
        %v1786 = vpop.permute.xlu0 %1785
        %v1788 = vsel %vm947, %v1447, 0
        %v1791 = vsel %vm1453, %v1786, 0
        %1793 = vmatprep.subr.bf16.mxu0 0
        %1794 = vmatpush1.bf16.msra.mxu0 %v1791
        %1795 = vmatprep.subr.bf16.mxu0 0
        %1796 = vmatpush1.bf16.msra.mxu0 0
        %1797 = vmatprep.subr.bf16.mxu0 0
        %1798 = vmatpush1.bf16.msra.mxu0 0
        %1799 = vmatprep.subr.bf16.mxu0 0
        %1800 = vmatpush1.bf16.msra.mxu0 0
        %1801 = vmatprep.subr.bf16.mxu0 0
        %1802 = vmatpush1.bf16.msra.mxu0 0
        %1803 = vmatprep.subr.bf16.mxu0 0
        %1804 = vmatpush1.bf16.msra.mxu0 0
        %1805 = vmatprep.subr.bf16.mxu0 0
        %1806 = vmatpush1.bf16.msra.mxu0 0
        %1807 = vmatprep.subr.bf16.mxu0 0
        %1808 = vmatpush1.bf16.msra.mxu0 0
        %1809 = vmatprep.subr.bf16.mxu0 0
        %1810 = vmatpush1.bf16.msra.mxu0 0
        %1811 = vmatprep.subr.bf16.mxu0 0
        %1812 = vmatpush1.bf16.msra.mxu0 0
        %1813 = vmatprep.subr.bf16.mxu0 0
        %1814 = vmatpush1.bf16.msra.mxu0 0
        %1815 = vmatprep.subr.bf16.mxu0 0
        %1816 = vmatpush1.bf16.msra.mxu0 0
        %1817 = vmatprep.subr.bf16.mxu0 0
        %1818 = vmatpush1.bf16.msra.mxu0 0
        %1819 = vmatprep.subr.bf16.mxu0 0
        %1820 = vmatpush1.bf16.msra.mxu0 0
        %1821 = vmatprep.subr.bf16.mxu0 0
        %1822 = vmatpush1.bf16.msra.mxu0 0
        %1823 = vmatprep.subr.bf16.mxu0 0
        %1824 = vmatpush1.bf16.msra.mxu0 0
        %1825 = vmatprep.mubr.bf16.mxu0 0
        %1826 = vmatmul.mubr.bf16.gmra.mrb[0].mxu0 %v1788
        %v1827 = vpop.f32.mrb[0].mxu0
        %v1828 = vadd.f32 0.0, %v1827
        %v1829 = vpop.f32.mrb[0].mxu0
        %v1830 = vpop.f32.mrb[0].mxu0
        %v1831 = vpop.f32.mrb[0].mxu0
        %1832 = vdwg.mxu0
        %1834 = vrot.lane.b32.xlu0 %v1540, 8
        %v1835 = vpop.permute.xlu0 %1834
        %1838 = vrot.lane.b32.xlu0 %v1588, 16
        %v1839 = vpop.permute.xlu0 %1838
        %1842 = vrot.lane.b32.xlu0 %v1636, 24
        %v1843 = vpop.permute.xlu0 %1842
        %v1845 = vsel %vm947, %v1492, %v1835
        %vm1846 = vcmask 130048
        %v1847 = vsel %vm1846, %v1845, %v1839
        %vm1848 = vcmask 195584
        %v1849 = vsel %vm1848, %v1847, %v1843
        %1851 = vrot.lane.b32.xlu0 %v1732, 8
        %v1852 = vpop.permute.xlu0 %1851
        %1855 = vrot.lane.b32.xlu0 %v1780, 16
        %v1856 = vpop.permute.xlu0 %1855
        %1859 = vrot.lane.b32.xlu0 %v1828, 24
        %v1860 = vpop.permute.xlu0 %1859
        %v1862 = vsel %vm947, %v1684, %v1852
        %v1863 = vsel %vm1846, %v1862, %v1856
        %v1864 = vsel %vm1848, %v1863, %v1860
        %v1865 = vpack.c.bf16 %v1864, %v1849
        %v1866 = vld [vmem:[%s770] sm:$0xf]
        %v1867 = vld [vmem:[%s770 + $0x4] sm:$0xf]
        %v1868 = vld [vmem:[%s770 + $0x8] sm:$0xf]
        %v1869 = vld [vmem:[%s770 + $0xc] sm:$0xf]
        %v1870 = vld [vmem:[%s773] sm:$0x1]
        %v1872 = vlaneseq
        %v1873 = vshrl.u32 %v1872, 7
        %v1874 = vsub.s32 0, %v1873
        %v1875 = vrot.slane %v1870, %v1874
        %v1881 = vunpack.c.l.b16 %v1866
        %v1882 = vunpack.c.l.b16 %v1867
        %v1883 = vunpack.c.l.b16 %v1868
        %v1884 = vunpack.c.l.b16 %v1869
        %v1885 = vpack.c.b16 %v1882, %v1881
        %v1886 = vpack.c.b16 %v1884, %v1883
        %v1890 = vsel %vm804, %v1865, 0
        %1892 = vmatprep.subr.bf16.mxu0 0
        %1893 = vmatpush1.bf16.msra.mxu0 %v1885
        %1894 = vmatprep.subr.bf16.mxu0 0
        %1895 = vmatpush1.bf16.msra.mxu0 %v1886
        %1896 = vmatprep.subr.bf16.mxu0 0
        %1897 = vmatpush1.bf16.msra.mxu0 0
        %1898 = vmatprep.subr.bf16.mxu0 0
        %1899 = vmatpush1.bf16.msra.mxu0 0
        %1900 = vmatprep.subr.bf16.mxu0 0
        %1901 = vmatpush1.bf16.msra.mxu0 0
        %1902 = vmatprep.subr.bf16.mxu0 0
        %1903 = vmatpush1.bf16.msra.mxu0 0
        %1904 = vmatprep.subr.bf16.mxu0 0
        %1905 = vmatpush1.bf16.msra.mxu0 0
        %1906 = vmatprep.subr.bf16.mxu0 0
        %1907 = vmatpush1.bf16.msra.mxu0 0
        %1908 = vmatprep.subr.bf16.mxu0 0
        %1909 = vmatpush1.bf16.msra.mxu0 0
        %1910 = vmatprep.subr.bf16.mxu0 0
        %1911 = vmatpush1.bf16.msra.mxu0 0
        %1912 = vmatprep.subr.bf16.mxu0 0
        %1913 = vmatpush1.bf16.msra.mxu0 0
        %1914 = vmatprep.subr.bf16.mxu0 0
        %1915 = vmatpush1.bf16.msra.mxu0 0
        %1916 = vmatprep.subr.bf16.mxu0 0
        %1917 = vmatpush1.bf16.msra.mxu0 0
        %1918 = vmatprep.subr.bf16.mxu0 0
        %1919 = vmatpush1.bf16.msra.mxu0 0
        %1920 = vmatprep.subr.bf16.mxu0 0
        %1921 = vmatpush1.bf16.msra.mxu0 0
        %1922 = vmatprep.subr.bf16.mxu0 0
        %1923 = vmatpush1.bf16.msra.mxu0 0
        %1924 = vmatprep.mubr.bf16.mxu0 0
        %1925 = vmatmul.mubr.bf16.gmra.mrb[0].mxu0 %v1890
        %v1926 = vpop.f32.mrb[0].mxu0
        %v1927 = vadd.f32 %v1875, %v1926
        %v1928 = vpop.f32.mrb[0].mxu0
        %v1929 = vpop.f32.mrb[0].mxu0
        %v1930 = vadd.f32 %v1875, %v1929
        %v1931 = vpop.f32.mrb[0].mxu0
        %1932 = vdwg.mxu0
        %v1933 = vadd.f32 %v1927, %v846
        %v1934 = vadd.f32 %v1930, %v847
        %v1935 = vld [vmem:[%s776] sm:$0x1]
        %v1936 = vld [vmem:[%s646] sm:$0x1]
        %v1937 = vsel %vm804, %v1933, 0.0
        %1938 = vadd.xlane.f32.xlu0 %v1937
        %v1939 = vpop.xlane.xlu0 %1938
        %v1940 = vsel %vm804, %v1934, 0.0
        %1941 = vadd.xlane.f32.xlu0 %v1940
        %v1942 = vpop.xlane.xlu0 %1941
        %v1943 = vmul.f32 %v1939, %v811
        %v1944 = vmul.f32 %v1942, %v811
        %v1945 = vsub.f32 %v1933, %v1943
        %v1946 = vsub.f32 %v1934, %v1944
        %v1947 = vmul.f32 %v1945, %v1945
        %v1948 = vmul.f32 %v1946, %v1946
        %v1949 = vsel %vm804, %v1947, 0.0
        %1950 = vadd.xlane.f32.xlu0 %v1949
        %v1951 = vpop.xlane.xlu0 %1950
        %v1952 = vsel %vm804, %v1948, 0.0
        %1953 = vadd.xlane.f32.xlu0 %v1952
        %v1954 = vpop.xlane.xlu0 %1953
        %v1955 = vmul.f32 %v1951, %v811
        %v1956 = vmul.f32 %v1954, %v811
        %v1957 = vadd.f32 %v1955, 1e-12
        %v1958 = vadd.f32 %v1956, 1e-12
        %v1959 = vrsqrt.pop %v1957
        %v1960 = vrsqrt.pop %v1958
        %v1961 = vmul.f32 %v1945, %v1959
        %v1962 = vmul.f32 %v1946, %v1960
        %v1964 = vlaneseq
        %v1965 = vshrl.u32 %v1964, 7
        %v1966 = vsub.s32 0, %v1965
        %v1967 = vrot.slane %v1935, %v1966
        %v1969 = vmul.f32 %v1961, %v1967
        %v1970 = vmul.f32 %v1962, %v1967
        %v1972 = vlaneseq
        %v1973 = vshrl.u32 %v1972, 7
        %v1974 = vsub.s32 0, %v1973
        %v1975 = vrot.slane %v1936, %v1974
        %v1977 = vadd.f32 %v1969, %v1975
        %v1978 = vadd.f32 %v1970, %v1975
        %v1979 = vpack.c.bf16 %v1978, %v1977
        %v1980 = vld [vmem:[%s781] sm:$0xf]
        %v1981 = vld [vmem:[%s781 + $0x4] sm:$0xf]
        %v1982 = vld [vmem:[%s781 + $0x8] sm:$0xf]
        %v1983 = vld [vmem:[%s781 + $0xc] sm:$0xf]
        %v1984 = vld [vmem:[%s654] sm:$0x1]
        %v1986 = vlaneseq
        %v1987 = vshrl.u32 %v1986, 7
        %v1988 = vsub.s32 0, %v1987
        %v1989 = vrot.slane %v1984, %v1988
        %v1995 = vunpack.c.l.b16 %v1980
        %v1996 = vunpack.c.l.b16 %v1981
        %v1997 = vunpack.c.l.b16 %v1982
        %v1998 = vunpack.c.l.b16 %v1983
        %v1999 = vpack.c.b16 %v1996, %v1995
        %v2000 = vpack.c.b16 %v1998, %v1997
        %v2004 = vsel %vm804, %v1979, 0
        %2006 = vmatprep.subr.bf16.mxu0 0
        %2007 = vmatpush1.bf16.msra.mxu0 %v1999
        %2008 = vmatprep.subr.bf16.mxu0 0
        %2009 = vmatpush1.bf16.msra.mxu0 %v2000
        %2010 = vmatprep.subr.bf16.mxu0 0
        %2011 = vmatpush1.bf16.msra.mxu0 0
        %2012 = vmatprep.subr.bf16.mxu0 0
        %2013 = vmatpush1.bf16.msra.mxu0 0
        %2014 = vmatprep.subr.bf16.mxu0 0
        %2015 = vmatpush1.bf16.msra.mxu0 0
        %2016 = vmatprep.subr.bf16.mxu0 0
        %2017 = vmatpush1.bf16.msra.mxu0 0
        %2018 = vmatprep.subr.bf16.mxu0 0
        %2019 = vmatpush1.bf16.msra.mxu0 0
        %2020 = vmatprep.subr.bf16.mxu0 0
        %2021 = vmatpush1.bf16.msra.mxu0 0
        %2022 = vmatprep.subr.bf16.mxu0 0
        %2023 = vmatpush1.bf16.msra.mxu0 0
        %2024 = vmatprep.subr.bf16.mxu0 0
        %2025 = vmatpush1.bf16.msra.mxu0 0
        %2026 = vmatprep.subr.bf16.mxu0 0
        %2027 = vmatpush1.bf16.msra.mxu0 0
        %2028 = vmatprep.subr.bf16.mxu0 0
        %2029 = vmatpush1.bf16.msra.mxu0 0
        %2030 = vmatprep.subr.bf16.mxu0 0
        %2031 = vmatpush1.bf16.msra.mxu0 0
        %2032 = vmatprep.subr.bf16.mxu0 0
        %2033 = vmatpush1.bf16.msra.mxu0 0
        %2034 = vmatprep.subr.bf16.mxu0 0
        %2035 = vmatpush1.bf16.msra.mxu0 0
        %2036 = vmatprep.subr.bf16.mxu0 0
        %2037 = vmatpush1.bf16.msra.mxu0 0
        %2038 = vmatprep.mubr.bf16.mxu0 0
        %2039 = vmatmul.mubr.bf16.gmra.mrb[0].mxu0 %v2004
        %v2040 = vpop.f32.mrb[0].mxu0
        %v2041 = vadd.f32 %v1989, %v2040
        %v2042 = vpop.f32.mrb[0].mxu0
        %v2043 = vpop.f32.mrb[0].mxu0
        %v2044 = vadd.f32 %v1989, %v2043
        %v2045 = vpop.f32.mrb[0].mxu0
        %2046 = vdwg.mxu0
        %v2047 = vmax.f32 %v2041, 0.0
        %v2048 = vmax.f32 %v2044, 0.0
        %v2049 = vpack.c.bf16 %v2048, %v2047
        %v2050 = vld [vmem:[%s786] sm:$0xf]
        %v2051 = vld [vmem:[%s786 + $0x4] sm:$0xf]
        %v2052 = vld [vmem:[%s786 + $0x8] sm:$0xf]
        %v2053 = vld [vmem:[%s786 + $0xc] sm:$0xf]
        %v2054 = vld [vmem:[%s786 + $0x10] sm:$0xf]
        %v2055 = vld [vmem:[%s786 + $0x14] sm:$0xf]
        %v2056 = vld [vmem:[%s786 + $0x18] sm:$0xf]
        %v2057 = vld [vmem:[%s786 + $0x1c] sm:$0xf]
        %v2058 = vld [vmem:[%s789] sm:$0x1]
        %v2060 = vlaneseq
        %v2061 = vshrl.u32 %v2060, 7
        %v2062 = vsub.s32 0, %v2061
        %v2063 = vrot.slane %v2058, %v2062
        %v2073 = vunpack.c.l.b16 %v2050
        %v2074 = vunpack.c.l.b16 %v2051
        %v2075 = vunpack.c.l.b16 %v2052
        %v2076 = vunpack.c.l.b16 %v2053
        %v2077 = vunpack.c.l.b16 %v2054
        %v2078 = vunpack.c.l.b16 %v2055
        %v2079 = vunpack.c.l.b16 %v2056
        %v2080 = vunpack.c.l.b16 %v2057
        %v2081 = vpack.c.b16 %v2074, %v2073
        %v2082 = vpack.c.b16 %v2076, %v2075
        %v2083 = vpack.c.b16 %v2078, %v2077
        %v2084 = vpack.c.b16 %v2080, %v2079
        %vm2089 = vcmask 523264
        %v2091 = vsel %vm2089, %v2049, 0
        %2093 = vmatprep.subr.bf16.mxu0 0
        %2094 = vmatpush1.bf16.msra.mxu0 %v2081
        %2095 = vmatprep.subr.bf16.mxu0 0
        %2096 = vmatpush1.bf16.msra.mxu0 %v2082
        %2097 = vmatprep.subr.bf16.mxu0 0
        %2098 = vmatpush1.bf16.msra.mxu0 %v2083
        %2099 = vmatprep.subr.bf16.mxu0 0
        %2100 = vmatpush1.bf16.msra.mxu0 %v2084
        %2101 = vmatprep.subr.bf16.mxu0 0
        %2102 = vmatpush1.bf16.msra.mxu0 0
        %2103 = vmatprep.subr.bf16.mxu0 0
        %2104 = vmatpush1.bf16.msra.mxu0 0
        %2105 = vmatprep.subr.bf16.mxu0 0
        %2106 = vmatpush1.bf16.msra.mxu0 0
        %2107 = vmatprep.subr.bf16.mxu0 0
        %2108 = vmatpush1.bf16.msra.mxu0 0
        %2109 = vmatprep.subr.bf16.mxu0 0
        %2110 = vmatpush1.bf16.msra.mxu0 0
        %2111 = vmatprep.subr.bf16.mxu0 0
        %2112 = vmatpush1.bf16.msra.mxu0 0
        %2113 = vmatprep.subr.bf16.mxu0 0
        %2114 = vmatpush1.bf16.msra.mxu0 0
        %2115 = vmatprep.subr.bf16.mxu0 0
        %2116 = vmatpush1.bf16.msra.mxu0 0
        %2117 = vmatprep.subr.bf16.mxu0 0
        %2118 = vmatpush1.bf16.msra.mxu0 0
        %2119 = vmatprep.subr.bf16.mxu0 0
        %2120 = vmatpush1.bf16.msra.mxu0 0
        %2121 = vmatprep.subr.bf16.mxu0 0
        %2122 = vmatpush1.bf16.msra.mxu0 0
        %2123 = vmatprep.subr.bf16.mxu0 0
        %2124 = vmatpush1.bf16.msra.mxu0 0
        %2125 = vmatprep.mubr.bf16.mxu0 0
        %2126 = vmatmul.mubr.bf16.gmra.mrb[0].mxu0 %v2091
        %v2127 = vpop.f32.mrb[0].mxu0
        %v2128 = vadd.f32 %v2063, %v2127
        %v2129 = vpop.f32.mrb[0].mxu0
        %v2130 = vpop.f32.mrb[0].mxu0
        %v2131 = vadd.f32 %v2063, %v2130
        %v2132 = vpop.f32.mrb[0].mxu0
        %2133 = vdwg.mxu0
        %v2134 = vadd.f32 %v2128, %v1977
        %v2135 = vadd.f32 %v2131, %v1978
        %2136 = vst.msk [vmem:[#allocation2] sm:$0xff] %vm804, %v2134
        %2137 = vst.msk [vmem:[#allocation2 + $0x8] sm:$0xff] %vm804, %v2135
        %p2138 = scmp.eq.s32.totalorder %s38, 1
        // Predicated region
        $region105: #{tpu_custom_call.1} parent=83 // pred_check
          %p2139 = pneg %p2138
        $region106: #{tpu_custom_call.1} parent=83 // pred_check_branch
          %2141 = sbr.rel (%p2139) target = $region108
        $region107: #{tpu_custom_call.1} parent=83 // pred_region
          %v2142 = vld [vmem:[%s751] sm:$0x3]
          %v2144 = vsel %vm1846, %v2142, 0
          %2146 = vmatprep.subr.mxu0 0.0
          %2147 = vmatpush1.msra.mxu0 %v2134
          %2148 = vmatprep.subr.mxu0 0.0
          %2149 = vmatpush1.msra.mxu0 %v2135
          %2150 = vmatprep.subr.mxu0 0.0
          %2151 = vmatpush1.msra.mxu0 0.0
          %2152 = vmatprep.subr.mxu0 0.0
          %2153 = vmatpush1.msra.mxu0 0.0
          %2154 = vmatprep.subr.mxu0 0.0
          %2155 = vmatpush1.msra.mxu0 0.0
          %2156 = vmatprep.subr.mxu0 0.0
          %2157 = vmatpush1.msra.mxu0 0.0
          %2158 = vmatprep.subr.mxu0 0.0
          %2159 = vmatpush1.msra.mxu0 0.0
          %2160 = vmatprep.subr.mxu0 0.0
          %2161 = vmatpush1.msra.mxu0 0.0
          %2162 = vmatprep.subr.mxu0 0.0
          %2163 = vmatpush1.msra.mxu0 0.0
          %2164 = vmatprep.subr.mxu0 0.0
          %2165 = vmatpush1.msra.mxu0 0.0
          %2166 = vmatprep.subr.mxu0 0.0
          %2167 = vmatpush1.msra.mxu0 0.0
          %2168 = vmatprep.subr.mxu0 0.0
          %2169 = vmatpush1.msra.mxu0 0.0
          %2170 = vmatprep.subr.mxu0 0.0
          %2171 = vmatpush1.msra.mxu0 0.0
          %2172 = vmatprep.subr.mxu0 0.0
          %2173 = vmatpush1.msra.mxu0 0.0
          %2174 = vmatprep.subr.mxu0 0.0
          %2175 = vmatpush1.msra.mxu0 0.0
          %2176 = vmatprep.subr.mxu0 0.0
          %2177 = vmatpush1.msra.mxu0 0.0
          %2178 = vmatprep.subr.mxu0 0.0
          %2179 = vmatpush1.msra.mxu0 0.0
          %2180 = vmatprep.subr.mxu0 0.0
          %2181 = vmatpush1.msra.mxu0 0.0
          %2182 = vmatprep.subr.mxu0 0.0
          %2183 = vmatpush1.msra.mxu0 0.0
          %2184 = vmatprep.subr.mxu0 0.0
          %2185 = vmatpush1.msra.mxu0 0.0
          %2186 = vmatprep.subr.mxu0 0.0
          %2187 = vmatpush1.msra.mxu0 0.0
          %2188 = vmatprep.subr.mxu0 0.0
          %2189 = vmatpush1.msra.mxu0 0.0
          %2190 = vmatprep.subr.mxu0 0.0
          %2191 = vmatpush1.msra.mxu0 0.0
          %2192 = vmatprep.subr.mxu0 0.0
          %2193 = vmatpush1.msra.mxu0 0.0
          %2194 = vmatprep.subr.mxu0 0.0
          %2195 = vmatpush1.msra.mxu0 0.0
          %2196 = vmatprep.subr.mxu0 0.0
          %2197 = vmatpush1.msra.mxu0 0.0
          %2198 = vmatprep.subr.mxu0 0.0
          %2199 = vmatpush1.msra.mxu0 0.0
          %2200 = vmatprep.subr.mxu0 0.0
          %2201 = vmatpush1.msra.mxu0 0.0
          %2202 = vmatprep.subr.mxu0 0.0
          %2203 = vmatpush1.msra.mxu0 0.0
          %2204 = vmatprep.subr.mxu0 0.0
          %2205 = vmatpush1.msra.mxu0 0.0
          %2206 = vmatprep.subr.mxu0 0.0
          %2207 = vmatpush1.msra.mxu0 0.0
          %2208 = vmatprep.subr.mxu0 0.0
          %2209 = vmatpush1.msra.mxu0 0.0
          %2210 = vmatprep.mubr.f32.mxu0 0.0
          %2211 = vmatmul.mubr.f32.gmra.mrb[0].mxu0 %v2144
          %v2212 = vpop.f32.mrb[0].mxu0
          %v2213 = vadd.f32 0.0, %v2212
          %v2214 = vpop.f32.mrb[0].mxu0
          %2215 = vdwg.mxu0
          %v2216 = vld [vmem:[#allocation9] sm:$0xff]
          %v2217 = vld [vmem:[#allocation9 + $0x8] sm:$0xff]
          %v2218 = vld [vmem:[#allocation9 + $0x10] sm:$0xff]
          %v2219 = vld [vmem:[#allocation9 + $0x18] sm:$0xff]
          %v2220 = vld [vmem:[%s15] sm:$0x1]
          %v2222 = vlaneseq
          %v2223 = vshrl.u32 %v2222, 7
          %v2224 = vsub.s32 0, %v2223
          %v2225 = vrot.slane %v2220, %v2224
          %v2228 = vsel %vm804, %v2213, 0
          %2230 = vmatprep.subr.mxu0 0.0
          %2231 = vmatpush1.msra.mxu0 %v2216
          %2232 = vmatprep.subr.mxu0 0.0
          %2233 = vmatpush1.msra.mxu0 %v2217
          %2234 = vmatprep.subr.mxu0 0.0
          %2235 = vmatpush1.msra.mxu0 %v2218
          %2236 = vmatprep.subr.mxu0 0.0
          %2237 = vmatpush1.msra.mxu0 %v2219
          %2238 = vmatprep.subr.mxu0 0.0
          %2239 = vmatpush1.msra.mxu0 0.0
          %2240 = vmatprep.subr.mxu0 0.0
          %2241 = vmatpush1.msra.mxu0 0.0
          %2242 = vmatprep.subr.mxu0 0.0
          %2243 = vmatpush1.msra.mxu0 0.0
          %2244 = vmatprep.subr.mxu0 0.0
          %2245 = vmatpush1.msra.mxu0 0.0
          %2246 = vmatprep.subr.mxu0 0.0
          %2247 = vmatpush1.msra.mxu0 0.0
          %2248 = vmatprep.subr.mxu0 0.0
          %2249 = vmatpush1.msra.mxu0 0.0
          %2250 = vmatprep.subr.mxu0 0.0
          %2251 = vmatpush1.msra.mxu0 0.0
          %2252 = vmatprep.subr.mxu0 0.0
          %2253 = vmatpush1.msra.mxu0 0.0
          %2254 = vmatprep.subr.mxu0 0.0
          %2255 = vmatpush1.msra.mxu0 0.0
          %2256 = vmatprep.subr.mxu0 0.0
          %2257 = vmatpush1.msra.mxu0 0.0
          %2258 = vmatprep.subr.mxu0 0.0
          %2259 = vmatpush1.msra.mxu0 0.0
          %2260 = vmatprep.subr.mxu0 0.0
          %2261 = vmatpush1.msra.mxu0 0.0
          %2262 = vmatprep.subr.mxu0 0.0
          %2263 = vmatpush1.msra.mxu0 0.0
          %2264 = vmatprep.subr.mxu0 0.0
          %2265 = vmatpush1.msra.mxu0 0.0
          %2266 = vmatprep.subr.mxu0 0.0
          %2267 = vmatpush1.msra.mxu0 0.0
          %2268 = vmatprep.subr.mxu0 0.0
          %2269 = vmatpush1.msra.mxu0 0.0
          %2270 = vmatprep.subr.mxu0 0.0
          %2271 = vmatpush1.msra.mxu0 0.0
          %2272 = vmatprep.subr.mxu0 0.0
          %2273 = vmatpush1.msra.mxu0 0.0
          %2274 = vmatprep.subr.mxu0 0.0
          %2275 = vmatpush1.msra.mxu0 0.0
          %2276 = vmatprep.subr.mxu0 0.0
          %2277 = vmatpush1.msra.mxu0 0.0
          %2278 = vmatprep.subr.mxu0 0.0
          %2279 = vmatpush1.msra.mxu0 0.0
          %2280 = vmatprep.subr.mxu0 0.0
          %2281 = vmatpush1.msra.mxu0 0.0
          %2282 = vmatprep.subr.mxu0 0.0
          %2283 = vmatpush1.msra.mxu0 0.0
          %2284 = vmatprep.subr.mxu0 0.0
          %2285 = vmatpush1.msra.mxu0 0.0
          %2286 = vmatprep.subr.mxu0 0.0
          %2287 = vmatpush1.msra.mxu0 0.0
          %2288 = vmatprep.subr.mxu0 0.0
          %2289 = vmatpush1.msra.mxu0 0.0
          %2290 = vmatprep.subr.mxu0 0.0
          %2291 = vmatpush1.msra.mxu0 0.0
          %2292 = vmatprep.subr.mxu0 0.0
          %2293 = vmatpush1.msra.mxu0 0.0
          %2294 = vmatprep.mubr.f32.mxu0 0.0
          %2295 = vmatmul.mubr.f32.gmra.mrb[0].mxu0 %v2228
          %v2296 = vpop.f32.mrb[0].mxu0
          %v2297 = vadd.f32 %v2225, %v2296
          %v2298 = vpop.f32.mrb[0].mxu0
          %2299 = vdwg.mxu0
          %2300 = vst [vmem:[#allocation11] sm:$0x3] %v2297
        $region108: #{tpu_custom_call.1} parent=83 // pred_fallthru
          _
        // Predicated region
        $region109: #{tpu_custom_call.1} parent=83 // pred_check
          %p2301 = pneg %p469
        $region110: #{tpu_custom_call.1} parent=83 // pred_check_branch
          %2303 = sbr.rel (%p2301) target = $region112
        $region111: #{tpu_custom_call.1} parent=83 // pred_region
          %s2305 = ssub.s32 32, 32
          %2306 = vsyncadd [#allocation5], %s2305
          %s2307 = smul.addr %s37, 32
          %s2308 = scalar_lea.hbm %s16, %s2307
          %s2310 = sshll.u32 [#allocation11], 4
          %s2311 = int_to_ptr.vmem [resolvable:$true] %s2310
          %2313 = dma.vmem_to_hbm [thread:$0]  %s2311, 32, %s2308, [#allocation5]
        $region112: #{tpu_custom_call.1} parent=83 // pred_fallthru
          _
        // Predicated region
        $region113: #{tpu_custom_call.1} parent=83 // pred_check
          %p2314 = pneg %p469
        $region114: #{tpu_custom_call.1} parent=83 // pred_check_branch
          %2316 = sbr.rel (%p2314) target = $region116
        $region115: #{tpu_custom_call.1} parent=83 // pred_region
          %2317 = dma.done [#allocation5], 32
        $region116: #{tpu_custom_call.1} parent=83 // pred_fallthru
          _
      $region84: #{tpu_custom_call.1} parent=5 // pred_fallthru
        _
      %p2318 = scmp.le.s32.totalorder 2, %s28
      // Predicated region
      $region117: #{tpu_custom_call.1} parent=5 // pred_check
        %p2319 = pneg %p2318
      $region118: #{tpu_custom_call.1} parent=5 // pred_check_branch
        %2321 = sbr.rel (%p2319) target = $region120
      $region119: #{tpu_custom_call.1} parent=5 // pred_region
        %s2322 = ssub.s32 %s28, 2
      $region120: #{tpu_custom_call.1} parent=5 // pred_fallthru
        _
    $region6: #{tpu_custom_call.1} parent=1 // loop_footer
      %s32 = sadd.s32 1, %s28
    $region7: #{tpu_custom_call.1} parent=1 // loop_footer_branch
      %27 = sbr.rel target = $region3
    $region8: #{tpu_custom_call.1} parent=1 // loop_exit
      _
    %2323 = vsyncpa [#allocation4], 1
    %s2324 = scalar_lea.sflag [#allocation4], 1
    %2325 = vsyncpa %s2324, 1
    %2326 = vsyncpa [#allocation7], 1
    %s2327 = scalar_lea.sflag [#allocation7], 1
    %2328 = vsyncpa %s2327, 1
    %2329 = vsyncpa [#allocation10], 1
    %2330 = vsyncpa [#allocation5], 1
    %s2331 = scalar_lea.sflag [#allocation5], 1
    %2332 = vsyncpa %s2331, 1

</llo_original>
